<compile_context>
chip_gen: v7x
topology: tpu7x:2x2x1
jax: 0.10.0
libtpu: 0.0.40
codegen_flags: <defaults>
</compile_context>

<pallas_src>
import functools

import jax
import jax.numpy as jnp
from jax import lax
from jax.experimental import pallas as pl
from jax.experimental.pallas import tpu as pltpu

EPS = 1e-5
LANE = 128
SUB = 16                          # bf16 sublane tile; window offsets stay aligned to it
_VMEM_LIMIT = 48 * 1024 * 1024


def _round_up(x, m):
    return (x + m - 1) // m * m


def fold_bn(gamma, beta, mean, var):
    scale = gamma / jnp.sqrt(var + EPS)
    bias = beta - mean * scale
    return scale, bias


def _prep_pointwise(w_hwio, bn, cin_p, cout_p):
    scale, bias = fold_bn(*bn)
    w = w_hwio[0, 0] * scale[None, :]                               # (cin, cout)
    w = jnp.pad(w, ((0, cin_p - w.shape[0]), (0, cout_p - w.shape[1])))
    b = jnp.pad(bias, (0, cout_p - bias.shape[0])).reshape(1, -1)
    return w.astype(jnp.bfloat16), b.astype(jnp.float32)


def _prep_conv(w_hwio, bn, cin_p, cout_p):
    kh, kw, cin, cout = w_hwio.shape
    scale, bias = fold_bn(*bn)
    w = w_hwio * scale[None, None, None, :]
    w = jnp.pad(w, ((0, 0), (0, 0), (0, cin_p - cin), (0, cout_p - cout)))
    w = w.reshape(kh * kw, cin_p, cout_p)
    b = jnp.pad(bias, (0, cout_p - cout)).reshape(1, -1)
    return w.astype(jnp.bfloat16), b.astype(jnp.float32)


# --------------------------------------------------------------------------- #
# Fused Bottleneck kernel: grid = (batch, conv2 taps)
# --------------------------------------------------------------------------- #
def _bottleneck_kernel(tab_ref, x_ref, mask_ref, w1_ref, b1_ref, w2_ref, b2_ref,
                       w3_ref, b3_ref, *rest, downsample, n_shift, UVp, V_pad,
                       HoV, Ho, Wo, T, res_start):
    if downsample:
        wd_ref, o_ref, h1_scr, acc_scr = rest
    else:
        o_ref, h1_scr, acc_scr = rest

    t = pl.program_id(1)
    r0 = tab_ref[1, t]          # tap row offset inside the plane
    c0 = tab_ref[2, t]          # tap column offset inside the plane
    first = tab_ref[3, t]       # 1 iff this tap is the first of its plane group

    # ---- conv1 (1x1) + folded BN + ReLU for the plane resident at this tap ----
    @pl.when(first == 1)
    def _():
        xp = x_ref[0, 0]                                            # (UVp, cin_p)
        h1 = jnp.dot(xp, w1_ref[...], preferred_element_type=jnp.float32)
        h1 = jnp.maximum(h1 + b1_ref[...], 0.0) * mask_ref[0]       # zero conv2 pad
        h1_scr[0:UVp, :] = h1.astype(h1_scr.dtype)
        # Pre-shifted copies so every tap window read below is 16-aligned.
        # TODO(synk): pltpu.roll(axis=0) could build these on the XLU instead.
        for k in range(1, n_shift):
            h1_scr[k * UVp:k * UVp + (UVp - k), :] = h1[k:, :].astype(h1_scr.dtype)

    # ---- one conv2 tap: aligned window read + MXU dot into the f32 scratch ----
    start = pl.multiple_of(c0 * UVp + r0 * V_pad, SUB)
    win = h1_scr[pl.ds(start, HoV), :]                              # (HoV, cmid)
    contrib = jnp.dot(win, w2_ref[0], preferred_element_type=jnp.float32)

    @pl.when(t == 0)
    def _():
        acc_scr[...] = contrib          # init from the first tap's dot (no zeros pass)

    @pl.when(t > 0)
    def _():
        acc_scr[...] += contrib

    # ---- epilogue: conv2 bias+ReLU, conv3, residual, ReLU, crop, bf16 write ----
    @pl.when(t == T - 1)
    def _():
        h2 = jnp.maximum(acc_scr[...] + b2_ref[...], 0.0).astype(jnp.bfloat16)
        y = jnp.dot(h2, w3_ref[...], preferred_element_type=jnp.float32)
        # The residual's plane is (by construction) the one resident at the last tap.
        x_win = x_ref[0, 0, pl.ds(res_start, HoV), :]
        if downsample:
            y = y + jnp.dot(x_win, wd_ref[...], preferred_element_type=jnp.float32)
        else:
            y = y + x_win.astype(jnp.float32)
        y = jnp.maximum(y + b3_ref[...], 0.0)
        cout = y.shape[-1]
        o_ref[0] = y.reshape(Ho, V_pad, cout)[:, :Wo, :].astype(o_ref.dtype)


# --------------------------------------------------------------------------- #
# Bottleneck forward
# --------------------------------------------------------------------------- #
@functools.partial(jax.jit,
                   static_argnames=("inplanes", "planes", "kernel_size", "stride",
                                    "padding"))
def bottleneck_forward(x_nchw, params, *, inplanes, planes, kernel_size, stride,
                       padding):
    if not isinstance(stride, tuple):
        stride = (stride, stride)
    if not isinstance(padding, tuple):
        padding = (padding, padding)
    sh, sw = stride
    ph, pw = padding
    kh = kw = kernel_size
    downsample = (max(sh, sw) != 1) or (inplanes != planes * 4)

    N, cin, H, W = x_nchw.shape
    cin_p = _round_up(cin, LANE)
    cmid_p = _round_up(planes, LANE)
    cout_p = _round_up(planes * 4, LANE)

    # ---- static geometry -----------------------------------------------------
    Hp, Wp = H + 2 * ph, W + 2 * pw
    Ho = (Hp - kh) // sh + 1
    Wo = (Wp - kw) // sw + 1
    if downsample:
        assert Ho == -(-H // sh) and Wo == -(-W // sw), "unsupported conv geometry"
    else:
        assert Ho == H and Wo == W, "identity residual needs conv2 to preserve H, W"
    r0_res, c0_res = ph // sh, pw // sw
    r0max, c0max = (kh - 1) // sh, (kw - 1) // sw
    n_shift = c0max + 1
    P = sh * sw
    V = -(-Wp // sw)
    V_pad = _round_up(max(V, Wo + c0max, Wo + c0_res), SUB)
    U = max(-(-Hp // sh), r0max + Ho, r0_res + Ho + (1 if c0_res > 0 else 0))
    UVp = U * V_pad
    HoV = Ho * V_pad
    T = kh * kw

    # ---- tap ordering: group by plane, residual's plane last ------------------
    def plane_of(i, j):
        return (i % sh) * sw + (j % sw)

    p_res = (ph % sh) * sw + (pw % sw)
    taps = [(i, j) for i in range(kh) for j in range(kw)]
    used = []
    for tp in taps:
        if plane_of(*tp) not in used:
            used.append(plane_of(*tp))
    assert p_res in used, "residual plane not covered by conv2 taps"
    plane_order = [p for p in used if p != p_res] + [p_res]
    ordered = [tp for p in plane_order for tp in taps if plane_of(*tp) == p]
    firsts, seen = [], set()
    for (i, j) in ordered:
        p = plane_of(i, j)
        firsts.append(1 if p not in seen else 0)
        seen.add(p)
    tap_tbl = jnp.asarray(
        [[plane_of(i, j) for (i, j) in ordered],
         [i // sh for (i, j) in ordered],
         [j // sw for (i, j) in ordered],
         firsts], dtype=jnp.int32)                       # (4, T) scalar prefetch

    # ---- input: NCHW -> NHWC, one combined pad, one phase-split transpose -----
    # TODO(synk): an NHWC bf16 (channel-padded) module boundary would remove the
    # NCHW transposes when bottlenecks are chained.
    x = jnp.transpose(x_nchw, (0, 2, 3, 1)).astype(jnp.bfloat16)
    x = jnp.pad(x, ((0, 0), (ph, U * sh - H - ph), (pw, V_pad * sw - W - pw),
                    (0, cin_p - cin)))
    x = x.reshape(N, U, sh, V_pad, sw, cin_p)
    x = jnp.transpose(x, (0, 2, 4, 1, 3, 5))
    xph = x.reshape(N, P, UVp, cin_p)                    # (N, planes, U*V_pad, cin)

    # ---- per-plane validity mask (conv2's zero padding after in-kernel conv1) -
    u = jnp.arange(U)
    v = jnp.arange(V_pad)
    masks = []
    for a in range(sh):
        for b in range(sw):
            row = a + u * sh
            col = b + v * sw
            m = ((row >= ph) & (row < H + ph))[:, None] & \
                ((col >= pw) & (col < W + pw))[None, :]
            masks.append(m.reshape(UVp, 1))
    mask_arr = jnp.stack(masks, axis=0).astype(jnp.float32)        # (P, UVp, 1)

    # ---- folded-BN weights (bf16 MXU operands, f32 biases) --------------------
    w1, b1 = _prep_pointwise(params["w1"], params["bn1"], cin_p, cmid_p)
    w2, b2 = _prep_conv(params["w2"], params["bn2"], cmid_p, cmid_p)
    w3, b3 = _prep_pointwise(params["w3"], params["bn3"], cmid_p, cout_p)
    perm = jnp.asarray([i * kw + j for (i, j) in ordered], dtype=jnp.int32)
    w2 = jnp.take(w2, perm, axis=0)                      # tap-streaming order
    if downsample:
        wd, bd = _prep_pointwise(params["wd"], params["bnd"], cin_p, cout_p)
        b3 = b3 + bd                                     # fold both biases
        extra_args = (wd,)
        extra_specs = [pl.BlockSpec((cin_p, cout_p), lambda n, t, tab: (0, 0))]
    else:
        extra_args = ()
        extra_specs = []

    kernel = functools.partial(
        _bottleneck_kernel, downsample=downsample, n_shift=n_shift, UVp=UVp,
        V_pad=V_pad, HoV=HoV, Ho=Ho, Wo=Wo, T=T,
        res_start=r0_res * V_pad + c0_res)

    grid_spec = pltpu.PrefetchScalarGridSpec(
        num_scalar_prefetch=1,
        grid=(N, T),
        in_specs=[
            pl.BlockSpec((1, 1, UVp, cin_p), lambda n, t, tab: (n, tab[0, t], 0, 0)),
            pl.BlockSpec((1, UVp, 1), lambda n, t, tab: (tab[0, t], 0, 0)),
            pl.BlockSpec((cin_p, cmid_p), lambda n, t, tab: (0, 0)),
            pl.BlockSpec((1, cmid_p), lambda n, t, tab: (0, 0)),
            pl.BlockSpec((1, cmid_p, cmid_p), lambda n, t, tab: (t, 0, 0)),
            pl.BlockSpec((1, cmid_p), lambda n, t, tab: (0, 0)),
            pl.BlockSpec((cmid_p, cout_p), lambda n, t, tab: (0, 0)),
            pl.BlockSpec((1, cout_p), lambda n, t, tab: (0, 0)),
        ] + extra_specs,
        out_specs=pl.BlockSpec((1, Ho, Wo, cout_p), lambda n, t, tab: (n, 0, 0, 0)),
        scratch_shapes=[
            pltpu.VMEM((n_shift * UVp, cmid_p), jnp.bfloat16),   # conv1 (shifted)
            pltpu.VMEM((HoV, cmid_p), jnp.float32),              # conv2 accumulator
        ],
    )

    y = pl.pallas_call(
        kernel,
        grid_spec=grid_spec,
        out_shape=jax.ShapeDtypeStruct((N, Ho, Wo, cout_p), jnp.bfloat16),
        compiler_params=pltpu.CompilerParams(
            dimension_semantics=("parallel", "arbitrary"),
            vmem_limit_bytes=_VMEM_LIMIT),
    )(tap_tbl, xph, mask_arr, w1, b1, w2, b2, w3, b3, *extra_args)

    # TODO(synk): in a chained ResNet keep the bf16 channel-padded NHWC output;
    # the crop / transpose / f32 cast below only honors the NCHW module boundary.
    y = y[..., :planes * 4].astype(jnp.float32)
    return jnp.transpose(y, (0, 3, 1, 2))                # NHWC -> NCHW


# --------------------------------------------------------------------------- #
# Parameters
# --------------------------------------------------------------------------- #
def init_bottleneck_params(key, inplanes, planes, kernel_size):
    def conv_w(k, kh, kw, cin, cout):
        return 0.1 * jax.random.normal(k, (kh, kw, cin, cout), jnp.float32)

    def bn(k, c):
        k1, k2, k3, k4 = jax.random.split(k, 4)
        gamma = 1.0 + 0.1 * jax.random.normal(k1, (c,), jnp.float32)
        beta = 0.1 * jax.random.normal(k2, (c,), jnp.float32)
        mean = 0.1 * jax.random.normal(k3, (c,), jnp.float32)
        var = jnp.abs(jax.random.normal(k4, (c,), jnp.float32)) + 0.5
        return gamma, beta, mean, var

    ks = jax.random.split(key, 8)
    return {
        "w1": conv_w(ks[0], 1, 1, inplanes, planes),
        "bn1": bn(ks[1], planes),
        "w2": conv_w(ks[2], kernel_size, kernel_size, planes, planes),
        "bn2": bn(ks[3], planes),
        "w3": conv_w(ks[4], 1, 1, planes, planes * 4),
        "bn3": bn(ks[5], planes * 4),
        "wd": conv_w(ks[6], 1, 1, inplanes, planes * 4),
        "bnd": bn(ks[7], planes * 4),
    }


# --------------------------------------------------------------------------- #
# Pure-JAX reference (lax.conv) mirroring the kernel's bf16/f32 precision
# --------------------------------------------------------------------------- #
def _ref_conv_bn(x, w_hwio, bn, stride, padding, act):
    scale, bias = fold_bn(*bn)
    w = (w_hwio * scale[None, None, None, :]).astype(jnp.bfloat16)
    y = lax.conv_general_dilated(
        x, w, stride, [(padding[0], padding[0]), (padding[1], padding[1])],
        dimension_numbers=("NHWC", "HWIO", "NHWC"),
        preferred_element_type=jnp.float32)
    y = y + bias
    if act:
        y = jnp.maximum(y, 0.0)
    return y


def bottleneck_ref(x_nchw, params, *, inplanes, planes, kernel_size, stride, padding):
    if not isinstance(stride, tuple):
        stride = (stride, stride)
    if not isinstance(padding, tuple):
        padding = (padding, padding)
    downsample = (max(stride) != 1) or (inplanes != planes * 4)
    x = jnp.transpose(x_nchw, (0, 2, 3, 1)).astype(jnp.bfloat16)
    h1 = _ref_conv_bn(x, params["w1"], params["bn1"], (1, 1), (0, 0), True).astype(jnp.bfloat16)
    h2 = _ref_conv_bn(h1, params["w2"], params["bn2"], stride, padding, True).astype(jnp.bfloat16)
    y = _ref_conv_bn(h2, params["w3"], params["bn3"], (1, 1), (0, 0), False)
    if downsample:
        r = _ref_conv_bn(x, params["wd"], params["bnd"], stride, (0, 0), False)
    else:
        r = x.astype(jnp.float32)
    out = jnp.maximum(y + r, 0.0)
    return jnp.transpose(out, (0, 3, 1, 2))


if __name__ == "__main__":
    # Bottleneck(inplanes=4, planes=4, kernel_size=3, stride=2, padding=1)
    inplanes, planes, kernel_size, stride, padding = 4, 4, 3, 2, 1

    key = jax.random.PRNGKey(0)
    kx, kp = jax.random.split(key)
    x = jax.random.normal(kx, (2, 4, 16, 16), jnp.float32)  # NCHW input
    params = init_bottleneck_params(kp, inplanes, planes, kernel_size)

    out = bottleneck_forward(
        x, params, inplanes=inplanes, planes=planes,
        kernel_size=kernel_size, stride=stride, padding=padding,
    )
    out = jax.block_until_ready(out)

    ref = bottleneck_ref(
        x, params, inplanes=inplanes, planes=planes,
        kernel_size=kernel_size, stride=stride, padding=padding,
    )
    assert out.shape == (2, planes * 4, 8, 8), out.shape
    max_err = float(jnp.max(jnp.abs(out - ref)))
    assert jnp.allclose(out, ref, atol=2e-2, rtol=2e-2), max_err

    print("KERNEL_OK")
</pallas_src>

<mosaic_0001>
module attributes {stable_mosaic.version = 11 : i64} {
  func.func @_bottleneck_kernel(%arg0: i32, %arg1: i32, %arg2: memref<4x9xi32, #tpu.memory_space<smem>>, %arg3: memref<1x1x144x128xbf16, #tpu.memory_space<vmem>>, %arg4: memref<1x144x1xf32, #tpu.memory_space<vmem>>, %arg5: memref<128x128xbf16, #tpu.memory_space<vmem>>, %arg6: memref<1x128xf32, #tpu.memory_space<vmem>>, %arg7: memref<1x128x128xbf16, #tpu.memory_space<vmem>>, %arg8: memref<1x128xf32, #tpu.memory_space<vmem>>, %arg9: memref<128x128xbf16, #tpu.memory_space<vmem>>, %arg10: memref<1x128xf32, #tpu.memory_space<vmem>>, %arg11: memref<128x128xbf16, #tpu.memory_space<vmem>>, %arg12: memref<1x8x8x128xbf16, #tpu.memory_space<vmem>>, %arg13: memref<288x128xbf16, #tpu.memory_space<vmem>>, %arg14: memref<128x128xf32, #tpu.memory_space<vmem>>) attributes {dimension_semantics = [#tpu.dimension_semantics<parallel>, #tpu.dimension_semantics<arbitrary>], iteration_bounds = array<i64: 2, 9>, scalar_prefetch = 1 : i64, scratch_operands = 2 : i64, tpu.core_type = #tpu.core_type<tc>, window_params = [{transform_indices = @transform_0, window_bounds = array<i64: 1, 1, 144, 128>}, {transform_indices = @transform_1, window_bounds = array<i64: 1, 144, 1>}, {pipeline_mode = #tpu.pipeline_mode<synchronous>, transform_indices = @transform_2, window_bounds = array<i64: 128, 128>}, {pipeline_mode = #tpu.pipeline_mode<synchronous>, transform_indices = @transform_3, window_bounds = array<i64: 1, 128>}, {transform_indices = @transform_4, window_bounds = array<i64: 1, 128, 128>}, {pipeline_mode = #tpu.pipeline_mode<synchronous>, transform_indices = @transform_5, window_bounds = array<i64: 1, 128>}, {pipeline_mode = #tpu.pipeline_mode<synchronous>, transform_indices = @transform_6, window_bounds = array<i64: 128, 128>}, {pipeline_mode = #tpu.pipeline_mode<synchronous>, transform_indices = @transform_7, window_bounds = array<i64: 1, 128>}, {pipeline_mode = #tpu.pipeline_mode<synchronous>, transform_indices = @transform_8, window_bounds = array<i64: 128, 128>}, {transform_indices = @transform_9, window_bounds = array<i64: 1, 8, 8, 128>}]} {
    %c1 = arith.constant 1 : index
    %0 = arith.index_cast %arg1 : i32 to index
    %1 = memref.load %arg2[%c1, %0] : memref<4x9xi32, #tpu.memory_space<smem>>
    %c2 = arith.constant 2 : index
    %2 = arith.index_cast %arg1 : i32 to index
    %3 = memref.load %arg2[%c2, %2] : memref<4x9xi32, #tpu.memory_space<smem>>
    %c3 = arith.constant 3 : index
    %4 = arith.index_cast %arg1 : i32 to index
    %5 = memref.load %arg2[%c3, %4] : memref<4x9xi32, #tpu.memory_space<smem>>
    %c1_i32 = arith.constant 1 : i32
    %6 = arith.cmpi eq, %5, %c1_i32 : i32
    %7 = arith.extui %6 : i1 to i32
    %c0_i32 = arith.constant 0 : i32
    %8 = arith.cmpi ne, %7, %c0_i32 : i32
    scf.if %8 {
      %c0_8 = arith.constant 0 : index
      %c0_9 = arith.constant 0 : index
      %c0_10 = arith.constant 0 : index
      %c0_11 = arith.constant 0 : index
      %27 = vector.load %arg3[%c0_8, %c0_9, %c0_10, %c0_11] : memref<1x1x144x128xbf16, #tpu.memory_space<vmem>>, vector<1x1x144x128xbf16>
      %28 = vector.shape_cast %27 : vector<1x1x144x128xbf16> to vector<144x128xbf16>
      %c0_12 = arith.constant 0 : index
      %c0_13 = arith.constant 0 : index
      %29 = vector.load %arg5[%c0_12, %c0_13] : memref<128x128xbf16, #tpu.memory_space<vmem>>, vector<128x128xbf16>
      %cst_14 = arith.constant dense<0.000000e+00> : vector<144x128xf32>
      %30 = tpu.matmul %28, %29, %cst_14 {dimension_numbers = #tpu.dot_dimension_numbers<[1], [0], [0], [1], [0, 0, 1, 1], [], []>} : vector<144x128xbf16>, vector<128x128xbf16>, vector<144x128xf32> -> vector<144x128xf32>
      %c0_15 = arith.constant 0 : index
      %c0_16 = arith.constant 0 : index
      %31 = vector.load %arg6[%c0_15, %c0_16] : memref<1x128xf32, #tpu.memory_space<vmem>>, vector<1x128xf32>
      %32 = vector.broadcast %31 : vector<1x128xf32> to vector<144x128xf32>
      %33 = arith.addf %30, %32 : vector<144x128xf32>
      %cst_17 = arith.constant 0.000000e+00 : f32
      %34 = vector.broadcast %cst_17 : f32 to vector<144x128xf32>
      %35 = arith.maximumf %33, %34 : vector<144x128xf32>
      %c0_18 = arith.constant 0 : index
      %c0_19 = arith.constant 0 : index
      %c0_20 = arith.constant 0 : index
      %36 = vector.load %arg4[%c0_18, %c0_19, %c0_20] : memref<1x144x1xf32, #tpu.memory_space<vmem>>, vector<1x144x1xf32>
      %37 = vector.shape_cast %36 : vector<1x144x1xf32> to vector<144x1xf32>
      %38 = vector.broadcast %37 : vector<144x1xf32> to vector<144x128xf32>
      %39 = arith.mulf %35, %38 : vector<144x128xf32>
      %40 = arith.truncf %39 : vector<144x128xf32> to vector<144x128xbf16>
      %c0_21 = arith.constant 0 : index
      %c0_22 = arith.constant 0 : index
      %41 = vector.load %arg13[%c0_21, %c0_22] : memref<288x128xbf16, #tpu.memory_space<vmem>>, vector<144x128xbf16>
      tpu.vector_store %arg13[%c0_21, %c0_22], %40 {strides = array<i32>} : memref<288x128xbf16, #tpu.memory_space<vmem>>, vector<144x128xbf16>,
      %42 = vector.extract_strided_slice %39 {offsets = [1, 0], sizes = [143, 128], strides = [1, 1]} : vector<144x128xf32> to vector<143x128xf32>
      %43 = arith.truncf %42 : vector<143x128xf32> to vector<143x128xbf16>
      %c144 = arith.constant 144 : index
      %c0_23 = arith.constant 0 : index
      %44 = vector.load %arg13[%c144, %c0_23] : memref<288x128xbf16, #tpu.memory_space<vmem>>, vector<143x128xbf16>
      tpu.vector_store %arg13[%c144, %c0_23], %43 {strides = array<i32>} : memref<288x128xbf16, #tpu.memory_space<vmem>>, vector<143x128xbf16>,
    } else {
    }
    %c144_i32 = arith.constant 144 : i32
    %9 = arith.muli %3, %c144_i32 : i32
    %c16_i32 = arith.constant 16 : i32
    %10 = arith.muli %1, %c16_i32 : i32
    %11 = arith.addi %9, %10 : i32
    %12 = tpu.assume_multiple %11, 16 : i32
    %13 = arith.index_cast %12 : i32 to index
    %c0 = arith.constant 0 : index
    %14 = vector.load %arg13[%13, %c0] : memref<288x128xbf16, #tpu.memory_space<vmem>>, vector<128x128xbf16>
    %c0_0 = arith.constant 0 : index
    %c0_1 = arith.constant 0 : index
    %c0_2 = arith.constant 0 : index
    %15 = vector.load %arg7[%c0_0, %c0_1, %c0_2] : memref<1x128x128xbf16, #tpu.memory_space<vmem>>, vector<1x128x128xbf16>
    %16 = vector.shape_cast %15 : vector<1x128x128xbf16> to vector<128x128xbf16>
    %cst = arith.constant dense<0.000000e+00> : vector<128x128xf32>
    %17 = tpu.matmul %14, %16, %cst {dimension_numbers = #tpu.dot_dimension_numbers<[1], [0], [0], [1], [0, 0, 1, 1], [], []>} : vector<128x128xbf16>, vector<128x128xbf16>, vector<128x128xf32> -> vector<128x128xf32>
    %c0_i32_3 = arith.constant 0 : i32
    %18 = arith.cmpi eq, %arg1, %c0_i32_3 : i32
    %19 = arith.extui %18 : i1 to i32
    %c0_i32_4 = arith.constant 0 : i32
    %20 = arith.cmpi ne, %19, %c0_i32_4 : i32
    scf.if %20 {
      %c0_8 = arith.constant 0 : index
      %c0_9 = arith.constant 0 : index
      %27 = vector.load %arg14[%c0_8, %c0_9] : memref<128x128xf32, #tpu.memory_space<vmem>>, vector<128x128xf32>
      tpu.vector_store %arg14[%c0_8, %c0_9], %17 {strides = array<i32>} : memref<128x128xf32, #tpu.memory_space<vmem>>, vector<128x128xf32>,
    } else {
    }
    %c0_i32_5 = arith.constant 0 : i32
    %21 = arith.cmpi sgt, %arg1, %c0_i32_5 : i32
    %22 = arith.extui %21 : i1 to i32
    %c0_i32_6 = arith.constant 0 : i32
    %23 = arith.cmpi ne, %22, %c0_i32_6 : i32
    scf.if %23 {
      %c0_8 = arith.constant 0 : index
      %c0_9 = arith.constant 0 : index
      %27 = vector.load %arg14[%c0_8, %c0_9] : memref<128x128xf32, #tpu.memory_space<vmem>>, vector<128x128xf32>
      %28 = arith.addf %27, %17 : vector<128x128xf32>
      %c0_10 = arith.constant 0 : index
      %c0_11 = arith.constant 0 : index
      %29 = vector.load %arg14[%c0_10, %c0_11] : memref<128x128xf32, #tpu.memory_space<vmem>>, vector<128x128xf32>
      tpu.vector_store %arg14[%c0_10, %c0_11], %28 {strides = array<i32>} : memref<128x128xf32, #tpu.memory_space<vmem>>, vector<128x128xf32>,
    } else {
    }
    %c8_i32 = arith.constant 8 : i32
    %24 = arith.cmpi eq, %arg1, %c8_i32 : i32
    %25 = arith.extui %24 : i1 to i32
    %c0_i32_7 = arith.constant 0 : i32
    %26 = arith.cmpi ne, %25, %c0_i32_7 : i32
    scf.if %26 {
      %c0_8 = arith.constant 0 : index
      %c0_9 = arith.constant 0 : index
      %27 = vector.load %arg14[%c0_8, %c0_9] : memref<128x128xf32, #tpu.memory_space<vmem>>, vector<128x128xf32>
      %c0_10 = arith.constant 0 : index
      %c0_11 = arith.constant 0 : index
      %28 = vector.load %arg8[%c0_10, %c0_11] : memref<1x128xf32, #tpu.memory_space<vmem>>, vector<1x128xf32>
      %29 = vector.broadcast %28 : vector<1x128xf32> to vector<128x128xf32>
      %30 = arith.addf %27, %29 : vector<128x128xf32>
      %cst_12 = arith.constant 0.000000e+00 : f32
      %31 = vector.broadcast %cst_12 : f32 to vector<128x128xf32>
      %32 = arith.maximumf %30, %31 : vector<128x128xf32>
      %33 = arith.truncf %32 : vector<128x128xf32> to vector<128x128xbf16>
      %c0_13 = arith.constant 0 : index
      %c0_14 = arith.constant 0 : index
      %34 = vector.load %arg9[%c0_13, %c0_14] : memref<128x128xbf16, #tpu.memory_space<vmem>>, vector<128x128xbf16>
      %cst_15 = arith.constant dense<0.000000e+00> : vector<128x128xf32>
      %35 = tpu.matmul %33, %34, %cst_15 {dimension_numbers = #tpu.dot_dimension_numbers<[1], [0], [0], [1], [0, 0, 1, 1], [], []>} : vector<128x128xbf16>, vector<128x128xbf16>, vector<128x128xf32> -> vector<128x128xf32>
      %c0_16 = arith.constant 0 : index
      %c0_17 = arith.constant 0 : index
      %c0_18 = arith.constant 0 : index
      %c0_19 = arith.constant 0 : index
      %36 = vector.load %arg3[%c0_16, %c0_17, %c0_18, %c0_19] : memref<1x1x144x128xbf16, #tpu.memory_space<vmem>>, vector<1x1x128x128xbf16>
      %37 = vector.shape_cast %36 : vector<1x1x128x128xbf16> to vector<128x128xbf16>
      %c0_20 = arith.constant 0 : index
      %c0_21 = arith.constant 0 : index
      %38 = vector.load %arg11[%c0_20, %c0_21] : memref<128x128xbf16, #tpu.memory_space<vmem>>, vector<128x128xbf16>
      %cst_22 = arith.constant dense<0.000000e+00> : vector<128x128xf32>
      %39 = tpu.matmul %37, %38, %cst_22 {dimension_numbers = #tpu.dot_dimension_numbers<[1], [0], [0], [1], [0, 0, 1, 1], [], []>} : vector<128x128xbf16>, vector<128x128xbf16>, vector<128x128xf32> -> vector<128x128xf32>
      %40 = arith.addf %35, %39 : vector<128x128xf32>
      %c0_23 = arith.constant 0 : index
      %c0_24 = arith.constant 0 : index
      %41 = vector.load %arg10[%c0_23, %c0_24] : memref<1x128xf32, #tpu.memory_space<vmem>>, vector<1x128xf32>
      %42 = vector.broadcast %41 : vector<1x128xf32> to vector<128x128xf32>
      %43 = arith.addf %40, %42 : vector<128x128xf32>
      %cst_25 = arith.constant 0.000000e+00 : f32
      %44 = vector.broadcast %cst_25 : f32 to vector<128x128xf32>
      %45 = arith.maximumf %43, %44 : vector<128x128xf32>
      %46 = vector.shape_cast %45 : vector<128x128xf32> to vector<8x16x128xf32>
      %47 = vector.extract_strided_slice %46 {offsets = [0, 0, 0], sizes = [8, 8, 128], strides = [1, 1, 1]} : vector<8x16x128xf32> to vector<8x8x128xf32>
      %48 = arith.truncf %47 : vector<8x8x128xf32> to vector<8x8x128xbf16>
      %c0_26 = arith.constant 0 : index
      %c0_27 = arith.constant 0 : index
      %c0_28 = arith.constant 0 : index
      %c0_29 = arith.constant 0 : index
      %49 = vector.load %arg12[%c0_26, %c0_27, %c0_28, %c0_29] : memref<1x8x8x128xbf16, #tpu.memory_space<vmem>>, vector<1x8x8x128xbf16>
      %50 = vector.shape_cast %49 : vector<1x8x8x128xbf16> to vector<8x8x128xbf16>
      %51 = vector.shape_cast %48 : vector<8x8x128xbf16> to vector<1x8x8x128xbf16>
      tpu.vector_store %arg12[%c0_26, %c0_27, %c0_28, %c0_29], %51 {strides = array<i32>} : memref<1x8x8x128xbf16, #tpu.memory_space<vmem>>, vector<1x8x8x128xbf16>,
    } else {
    }
    return
  }
  func.func @transform_0(%arg0: i32, %arg1: i32, %arg2: memref<4x9xi32, #tpu.memory_space<smem>>) -> (i32, i32, i32, i32) {
    %c0 = arith.constant 0 : index
    %0 = arith.index_cast %arg1 : i32 to index
    %1 = memref.load %arg2[%c0, %0] : memref<4x9xi32, #tpu.memory_space<smem>>
    %c0_i32 = arith.constant 0 : i32
    %c0_i32_0 = arith.constant 0 : i32
    %c0_i32_1 = arith.constant 0 : i32
    return %arg0, %1, %c0_i32, %c0_i32_0 : i32, i32, i32, i32
  }
  func.func @transform_1(%arg0: i32, %arg1: i32, %arg2: memref<4x9xi32, #tpu.memory_space<smem>>) -> (i32, i32, i32) {
    %c0 = arith.constant 0 : index
    %0 = arith.index_cast %arg1 : i32 to index
    %1 = memref.load %arg2[%c0, %0] : memref<4x9xi32, #tpu.memory_space<smem>>
    %c0_i32 = arith.constant 0 : i32
    %c0_i32_0 = arith.constant 0 : i32
    %c0_i32_1 = arith.constant 0 : i32
    return %1, %c0_i32, %c0_i32_0 : i32, i32, i32
  }
  func.func @transform_2(%arg0: i32, %arg1: i32, %arg2: memref<4x9xi32, #tpu.memory_space<smem>>) -> (i32, i32) {
    %c0_i32 = arith.constant 0 : i32
    %c0_i32_0 = arith.constant 0 : i32
    %c0_i32_1 = arith.constant 0 : i32
    return %c0_i32, %c0_i32_0 : i32, i32
  }
  func.func @transform_3(%arg0: i32, %arg1: i32, %arg2: memref<4x9xi32, #tpu.memory_space<smem>>) -> (i32, i32) {
    %c0_i32 = arith.constant 0 : i32
    %c0_i32_0 = arith.constant 0 : i32
    %c0_i32_1 = arith.constant 0 : i32
    return %c0_i32, %c0_i32_0 : i32, i32
  }
  func.func @transform_4(%arg0: i32, %arg1: i32, %arg2: memref<4x9xi32, #tpu.memory_space<smem>>) -> (i32, i32, i32) {
    %c0_i32 = arith.constant 0 : i32
    %c0_i32_0 = arith.constant 0 : i32
    %c0_i32_1 = arith.constant 0 : i32
    return %arg1, %c0_i32, %c0_i32_0 : i32, i32, i32
  }
  func.func @transform_5(%arg0: i32, %arg1: i32, %arg2: memref<4x9xi32, #tpu.memory_space<smem>>) -> (i32, i32) {
    %c0_i32 = arith.constant 0 : i32
    %c0_i32_0 = arith.constant 0 : i32
    %c0_i32_1 = arith.constant 0 : i32
    return %c0_i32, %c0_i32_0 : i32, i32
  }
  func.func @transform_6(%arg0: i32, %arg1: i32, %arg2: memref<4x9xi32, #tpu.memory_space<smem>>) -> (i32, i32) {
    %c0_i32 = arith.constant 0 : i32
    %c0_i32_0 = arith.constant 0 : i32
    %c0_i32_1 = arith.constant 0 : i32
    return %c0_i32, %c0_i32_0 : i32, i32
  }
  func.func @transform_7(%arg0: i32, %arg1: i32, %arg2: memref<4x9xi32, #tpu.memory_space<smem>>) -> (i32, i32) {
    %c0_i32 = arith.constant 0 : i32
    %c0_i32_0 = arith.constant 0 : i32
    %c0_i32_1 = arith.constant 0 : i32
    return %c0_i32, %c0_i32_0 : i32, i32
  }
  func.func @transform_8(%arg0: i32, %arg1: i32, %arg2: memref<4x9xi32, #tpu.memory_space<smem>>) -> (i32, i32) {
    %c0_i32 = arith.constant 0 : i32
    %c0_i32_0 = arith.constant 0 : i32
    %c0_i32_1 = arith.constant 0 : i32
    return %c0_i32, %c0_i32_0 : i32, i32
  }
  func.func @transform_9(%arg0: i32, %arg1: i32, %arg2: memref<4x9xi32, #tpu.memory_space<smem>>) -> (i32, i32, i32, i32) {
    %c0_i32 = arith.constant 0 : i32
    %c0_i32_0 = arith.constant 0 : i32
    %c0_i32_1 = arith.constant 0 : i32
    %c0_i32_2 = arith.constant 0 : i32
    return %arg0, %c0_i32, %c0_i32_0, %c0_i32_1 : i32, i32, i32, i32
  }
}

</mosaic_0001>

<llo_original>
// kernel: bottleneck_forward.1
$region0: #{bottleneck_forward.1}
  #allocation0 [shape = 'u32[]', space=smem, size = 0x4, offset = 0x4, fixed_abs, tag = 'smem constant byte address 0x4 - core index']
  #allocation1 [shape = 'u32[144,128]{1,0:T(1,128)}', space=vmem, size = 0x12000, scoped, tag = 'internal scratch']
  #allocation2 [shape = 'bf16[288,128]{1,0:T(16,128)(2,1)}', space=vmem, size = 0x12000, scoped, tag = 'scratch operand']
  #allocation3 [shape = 'f32[128,128]{1,0:T(8,128)}', space=vmem, size = 0x10000, scoped, tag = 'scratch operand']
  #allocation4 [shape = 's32[1]{0}', space=sflag, size = 0x4, scoped, tag = 'scoped memory for bottleneck_forward.1']
  #allocation5 [shape = 'u8[2048]{0}', space=smem, size = 0x800, scoped, tag = 'prefetched SMEM operand 0']
  %s0 = inlined_call_operand.vmem [shape: s32[4,9], index: 0, kind: input, shape index: {}]
  %s1 = inlined_call_operand.vmem [shape: bf16[2,4,144,128], index: 1, kind: input, shape index: {}]
  %s2 = inlined_call_operand.vmem [shape: f32[4,144,1], index: 2, kind: input, shape index: {}]
  %s3 = inlined_call_operand.vmem [shape: bf16[128,128], index: 3, kind: input, shape index: {}]
  %s4 = inlined_call_operand.vmem [shape: f32[1,128], index: 4, kind: input, shape index: {}]
  %s5 = inlined_call_operand.vmem [shape: bf16[9,128,128], index: 5, kind: input, shape index: {}]
  %s6 = inlined_call_operand.vmem [shape: f32[1,128], index: 6, kind: input, shape index: {}]
  %s7 = inlined_call_operand.vmem [shape: bf16[128,128], index: 7, kind: input, shape index: {}]
  %s8 = inlined_call_operand.vmem [shape: f32[1,128], index: 8, kind: input, shape index: {}]
  %s9 = inlined_call_operand.vmem [shape: bf16[128,128], index: 9, kind: input, shape index: {}]
  %s10 = inlined_call_operand.vmem [shape: bf16[2,8,8,128], index: 10, kind: output, shape index: {}]
  %s11 = sld [smem:[#allocation0]]
  $region85: #{bottleneck_forward.1} parent=0
    _
  %s13 = ssub.s32 1, %s11
  %s14 = scalar_select 0, %s13, %s11
  %s15 = sshll.u32 %s0, 4
  %s16 = int_to_ptr.vmem [resolvable:$true] %s15
  %18 = dma.vmem_to_smem %s16, 64, [#allocation5], [#allocation4]
  %19 = dma.done [#allocation4], 64
  %20 = sfence
  loop: start=0, step=1, limit=20
  $region2: #{bottleneck_forward.1} parent=0 // loop_pre_header
    _
  $region3: #{bottleneck_forward.1} parent=0 // loop_header
    %s22 = sphi 0, %s26
    %p23 = scmp.ge.s32.totalorder %s22, 20
    %s29 = sphi 0, %s41
    %s30 = sphi 0, %s37
    %s31 = sphi 0, %s29
    %s32 = sphi 0, %s30
    %s33 = sphi 0, %s31
    %s34 = sphi 0, %s32
    %s48 = sphi 0, %s50
    %s51 = sphi 0, %s48
    %s52 = sphi 0, %s51
    %s68 = sphi 0, %s52
    %s76 = sphi 0, %s78
    %s79 = sphi 0, %s76
    %s80 = sphi 0, %s79
    %s96 = sphi 0, %s80
    %s100 = sphi 0, %s100
    %s102 = sphi 0, %s100
    %s103 = sphi 0, %s102
    %s117 = sphi 0, %s103
    %s121 = sphi 0, %s121
    %s123 = sphi 0, %s121
    %s124 = sphi 0, %s123
    %s138 = sphi 0, %s124
    %s144 = sphi 0, %s146
    %s147 = sphi 0, %s144
    %s148 = sphi 0, %s147
    %s164 = sphi 0, %s148
    %s168 = sphi 0, %s168
    %s170 = sphi 0, %s168
    %s171 = sphi 0, %s170
    %s185 = sphi 0, %s171
    %s189 = sphi 0, %s189
    %s191 = sphi 0, %s189
    %s192 = sphi 0, %s191
    %s206 = sphi 0, %s192
    %s210 = sphi 0, %s210
    %s212 = sphi 0, %s210
    %s213 = sphi 0, %s212
    %s227 = sphi 0, %s213
    %s231 = sphi 0, %s231
    %s233 = sphi 0, %s231
    %s234 = sphi 0, %s233
    %s248 = sphi 0, %s234
    %s254 = sphi 0, %s256
    %s257 = sphi 0, %s254
    %s258 = sphi 0, %s257
    %s274 = sphi 0, %s258
  $region4: #{bottleneck_forward.1} parent=0 // loop_header_branch
    %25 = sbr.rel (%p23) target = $region8
  $region5: #{bottleneck_forward.1} parent=0 // loop_body
    %s27 = ssub.s32 %s22, 1
    %s28 = ssub.s32 %s22, 2
    %s35 = sadd.s32 1, %s30
    %p36 = scmp.ge.s32.totalorder %s35, 9
    %s37 = scalar_select %p36, 0, %s35
    %s38 = sadd.s32 1, %s29
    %s39 = scalar_select %p36, %s38, %s29
    %p40 = scmp.ge.s32.totalorder %s39, 2
    %s41 = scalar_select %p40, 0, %s39
    %s42 = sld [smem:[#allocation5 + %s30]]
    %s43 = sld [smem:[#allocation5 + %s37]]
    %s44 = ssub.s32 %s29, %s41
    %s45 = ssub.s32 %s42, %s43
    %s46 = sor.u32 %s44, %s45
    %p47 = scmp.eq.s32.totalorder %s46, 0
    %s49 = sadd.s32 %s48, 1
    %s50 = scalar_select %p47, %s48, %s49
    %p53 = pneg %p47
    %p54 = scmp.eq.s32.totalorder %s22, 17
    %p55 = por %p53, %p54
    %p56 = scmp.ne.s32.totalorder %s48, %s51
    %p57 = scmp.eq.s32.totalorder %s22, 0
    %p58 = por %p56, %p57
    %p59 = scmp.ne.s32.totalorder %s48, %s51
    %p60 = scmp.eq.s32.totalorder %s27, 17
    %p61 = por %p59, %p60
    %p62 = scmp.ne.s32.totalorder %s51, %s52
    %p63 = scmp.eq.s32.totalorder %s27, 0
    %p64 = por %p62, %p63
    %p65 = scmp.ne.s32.totalorder %s51, %s52
    %p66 = scmp.eq.s32.totalorder %s28, 17
    %p67 = por %p65, %p66
    %p69 = scmp.ne.s32.totalorder %s52, %s68
    %p70 = scmp.eq.s32.totalorder %s28, 0
    %p71 = por %p69, %p70
    %s72 = sld [smem:[#allocation5 + %s30]]
    %s73 = sld [smem:[#allocation5 + %s37]]
    %s74 = ssub.s32 %s72, %s73
    %p75 = scmp.eq.s32.totalorder %s74, 0
    %s77 = sadd.s32 %s76, 1
    %s78 = scalar_select %p75, %s76, %s77
    %p81 = pneg %p75
    %p82 = scmp.eq.s32.totalorder %s22, 17
    %p83 = por %p81, %p82
    %p84 = scmp.ne.s32.totalorder %s76, %s79
    %p85 = scmp.eq.s32.totalorder %s22, 0
    %p86 = por %p84, %p85
    %p87 = scmp.ne.s32.totalorder %s76, %s79
    %p88 = scmp.eq.s32.totalorder %s27, 17
    %p89 = por %p87, %p88
    %p90 = scmp.ne.s32.totalorder %s79, %s80
    %p91 = scmp.eq.s32.totalorder %s27, 0
    %p92 = por %p90, %p91
    %p93 = scmp.ne.s32.totalorder %s79, %s80
    %p94 = scmp.eq.s32.totalorder %s28, 17
    %p95 = por %p93, %p94
    %p97 = scmp.ne.s32.totalorder %s80, %s96
    %p98 = scmp.eq.s32.totalorder %s28, 0
    %p99 = por %p97, %p98
    %s101 = sadd.s32 %s100, 1
    %p104 = scmp.eq.s32.totalorder %s22, 17
    %p105 = scmp.ne.s32.totalorder %s100, %s102
    %p106 = scmp.eq.s32.totalorder %s22, 0
    %p107 = por %p105, %p106
    %p108 = scmp.ne.s32.totalorder %s100, %s102
    %p109 = scmp.eq.s32.totalorder %s27, 17
    %p110 = por %p108, %p109
    %p111 = scmp.ne.s32.totalorder %s102, %s103
    %p112 = scmp.eq.s32.totalorder %s27, 0
    %p113 = por %p111, %p112
    %p114 = scmp.ne.s32.totalorder %s102, %s103
    %p115 = scmp.eq.s32.totalorder %s28, 17
    %p116 = por %p114, %p115
    %p118 = scmp.ne.s32.totalorder %s103, %s117
    %p119 = scmp.eq.s32.totalorder %s28, 0
    %p120 = por %p118, %p119
    %s122 = sadd.s32 %s121, 1
    %p125 = scmp.eq.s32.totalorder %s22, 17
    %p126 = scmp.ne.s32.totalorder %s121, %s123
    %p127 = scmp.eq.s32.totalorder %s22, 0
    %p128 = por %p126, %p127
    %p129 = scmp.ne.s32.totalorder %s121, %s123
    %p130 = scmp.eq.s32.totalorder %s27, 17
    %p131 = por %p129, %p130
    %p132 = scmp.ne.s32.totalorder %s123, %s124
    %p133 = scmp.eq.s32.totalorder %s27, 0
    %p134 = por %p132, %p133
    %p135 = scmp.ne.s32.totalorder %s123, %s124
    %p136 = scmp.eq.s32.totalorder %s28, 17
    %p137 = por %p135, %p136
    %p139 = scmp.ne.s32.totalorder %s124, %s138
    %p140 = scmp.eq.s32.totalorder %s28, 0
    %p141 = por %p139, %p140
    %s142 = ssub.s32 %s30, %s37
    %p143 = scmp.eq.s32.totalorder %s142, 0
    %s145 = sadd.s32 %s144, 1
    %s146 = scalar_select %p143, %s144, %s145
    %p149 = pneg %p143
    %p150 = scmp.eq.s32.totalorder %s22, 17
    %p151 = por %p149, %p150
    %p152 = scmp.ne.s32.totalorder %s144, %s147
    %p153 = scmp.eq.s32.totalorder %s22, 0
    %p154 = por %p152, %p153
    %p155 = scmp.ne.s32.totalorder %s144, %s147
    %p156 = scmp.eq.s32.totalorder %s27, 17
    %p157 = por %p155, %p156
    %p158 = scmp.ne.s32.totalorder %s147, %s148
    %p159 = scmp.eq.s32.totalorder %s27, 0
    %p160 = por %p158, %p159
    %p161 = scmp.ne.s32.totalorder %s147, %s148
    %p162 = scmp.eq.s32.totalorder %s28, 17
    %p163 = por %p161, %p162
    %p165 = scmp.ne.s32.totalorder %s148, %s164
    %p166 = scmp.eq.s32.totalorder %s28, 0
    %p167 = por %p165, %p166
    %s169 = sadd.s32 %s168, 1
    %p172 = scmp.eq.s32.totalorder %s22, 17
    %p173 = scmp.ne.s32.totalorder %s168, %s170
    %p174 = scmp.eq.s32.totalorder %s22, 0
    %p175 = por %p173, %p174
    %p176 = scmp.ne.s32.totalorder %s168, %s170
    %p177 = scmp.eq.s32.totalorder %s27, 17
    %p178 = por %p176, %p177
    %p179 = scmp.ne.s32.totalorder %s170, %s171
    %p180 = scmp.eq.s32.totalorder %s27, 0
    %p181 = por %p179, %p180
    %p182 = scmp.ne.s32.totalorder %s170, %s171
    %p183 = scmp.eq.s32.totalorder %s28, 17
    %p184 = por %p182, %p183
    %p186 = scmp.ne.s32.totalorder %s171, %s185
    %p187 = scmp.eq.s32.totalorder %s28, 0
    %p188 = por %p186, %p187
    %s190 = sadd.s32 %s189, 1
    %p193 = scmp.eq.s32.totalorder %s22, 17
    %p194 = scmp.ne.s32.totalorder %s189, %s191
    %p195 = scmp.eq.s32.totalorder %s22, 0
    %p196 = por %p194, %p195
    %p197 = scmp.ne.s32.totalorder %s189, %s191
    %p198 = scmp.eq.s32.totalorder %s27, 17
    %p199 = por %p197, %p198
    %p200 = scmp.ne.s32.totalorder %s191, %s192
    %p201 = scmp.eq.s32.totalorder %s27, 0
    %p202 = por %p200, %p201
    %p203 = scmp.ne.s32.totalorder %s191, %s192
    %p204 = scmp.eq.s32.totalorder %s28, 17
    %p205 = por %p203, %p204
    %p207 = scmp.ne.s32.totalorder %s192, %s206
    %p208 = scmp.eq.s32.totalorder %s28, 0
    %p209 = por %p207, %p208
    %s211 = sadd.s32 %s210, 1
    %p214 = scmp.eq.s32.totalorder %s22, 17
    %p215 = scmp.ne.s32.totalorder %s210, %s212
    %p216 = scmp.eq.s32.totalorder %s22, 0
    %p217 = por %p215, %p216
    %p218 = scmp.ne.s32.totalorder %s210, %s212
    %p219 = scmp.eq.s32.totalorder %s27, 17
    %p220 = por %p218, %p219
    %p221 = scmp.ne.s32.totalorder %s212, %s213
    %p222 = scmp.eq.s32.totalorder %s27, 0
    %p223 = por %p221, %p222
    %p224 = scmp.ne.s32.totalorder %s212, %s213
    %p225 = scmp.eq.s32.totalorder %s28, 17
    %p226 = por %p224, %p225
    %p228 = scmp.ne.s32.totalorder %s213, %s227
    %p229 = scmp.eq.s32.totalorder %s28, 0
    %p230 = por %p228, %p229
    %s232 = sadd.s32 %s231, 1
    %p235 = scmp.eq.s32.totalorder %s22, 17
    %p236 = scmp.ne.s32.totalorder %s231, %s233
    %p237 = scmp.eq.s32.totalorder %s22, 0
    %p238 = por %p236, %p237
    %p239 = scmp.ne.s32.totalorder %s231, %s233
    %p240 = scmp.eq.s32.totalorder %s27, 17
    %p241 = por %p239, %p240
    %p242 = scmp.ne.s32.totalorder %s233, %s234
    %p243 = scmp.eq.s32.totalorder %s27, 0
    %p244 = por %p242, %p243
    %p245 = scmp.ne.s32.totalorder %s233, %s234
    %p246 = scmp.eq.s32.totalorder %s28, 17
    %p247 = por %p245, %p246
    %p249 = scmp.ne.s32.totalorder %s234, %s248
    %p250 = scmp.eq.s32.totalorder %s28, 0
    %p251 = por %p249, %p250
    %s252 = ssub.s32 %s29, %s41
    %p253 = scmp.eq.s32.totalorder %s252, 0
    %s255 = sadd.s32 %s254, 1
    %s256 = scalar_select %p253, %s254, %s255
    %p259 = pneg %p253
    %p260 = scmp.eq.s32.totalorder %s22, 17
    %p261 = por %p259, %p260
    %p262 = scmp.ne.s32.totalorder %s254, %s257
    %p263 = scmp.eq.s32.totalorder %s22, 0
    %p264 = por %p262, %p263
    %p265 = scmp.ne.s32.totalorder %s254, %s257
    %p266 = scmp.eq.s32.totalorder %s27, 17
    %p267 = por %p265, %p266
    %p268 = scmp.ne.s32.totalorder %s257, %s258
    %p269 = scmp.eq.s32.totalorder %s27, 0
    %p270 = por %p268, %p269
    %p271 = scmp.ne.s32.totalorder %s257, %s258
    %p272 = scmp.eq.s32.totalorder %s28, 17
    %p273 = por %p271, %p272
    %p275 = scmp.ne.s32.totalorder %s258, %s274
    %p276 = scmp.eq.s32.totalorder %s28, 0
    %p277 = por %p275, %p276
    %p278 = scmp.le.s32.totalorder 1, %s22
    %p279 = scmp.lt.s32.totalorder %s22, 19
    %p280 = pnand %p278, %p279
    %p281 = pneg %p280
    // Predicated region
    $region9: #{bottleneck_forward.1} parent=5 // pred_check
      _
    $region10: #{bottleneck_forward.1} parent=5 // pred_check_branch
      %283 = sbr.rel (%p280) target = $region12
    $region11: #{bottleneck_forward.1} parent=5 // pred_region
      %s284 = ssub.s32 %s22, 1
      // Predicated region
      $region13: #{bottleneck_forward.1} parent=11 // pred_check
        %p285 = pneg %p113
      $region14: #{bottleneck_forward.1} parent=11 // pred_check_branch
        %287 = sbr.rel (%p285) target = $region16
      $region15: #{bottleneck_forward.1} parent=11 // pred_region
        _
      $region16: #{bottleneck_forward.1} parent=11 // pred_fallthru
        _
      // Predicated region
      $region17: #{bottleneck_forward.1} parent=11 // pred_check
        %p288 = pneg %p134
      $region18: #{bottleneck_forward.1} parent=11 // pred_check_branch
        %290 = sbr.rel (%p288) target = $region20
      $region19: #{bottleneck_forward.1} parent=11 // pred_region
        _
      $region20: #{bottleneck_forward.1} parent=11 // pred_fallthru
        _
      // Predicated region
      $region21: #{bottleneck_forward.1} parent=11 // pred_check
        %p291 = pneg %p181
      $region22: #{bottleneck_forward.1} parent=11 // pred_check_branch
        %293 = sbr.rel (%p291) target = $region24
      $region23: #{bottleneck_forward.1} parent=11 // pred_region
        _
      $region24: #{bottleneck_forward.1} parent=11 // pred_fallthru
        _
      // Predicated region
      $region25: #{bottleneck_forward.1} parent=11 // pred_check
        %p294 = pneg %p202
      $region26: #{bottleneck_forward.1} parent=11 // pred_check_branch
        %296 = sbr.rel (%p294) target = $region28
      $region27: #{bottleneck_forward.1} parent=11 // pred_region
        _
      $region28: #{bottleneck_forward.1} parent=11 // pred_fallthru
        _
      // Predicated region
      $region29: #{bottleneck_forward.1} parent=11 // pred_check
        %p297 = pneg %p223
      $region30: #{bottleneck_forward.1} parent=11 // pred_check_branch
        %299 = sbr.rel (%p297) target = $region32
      $region31: #{bottleneck_forward.1} parent=11 // pred_region
        _
      $region32: #{bottleneck_forward.1} parent=11 // pred_fallthru
        _
      // Predicated region
      $region33: #{bottleneck_forward.1} parent=11 // pred_check
        %p300 = pneg %p244
      $region34: #{bottleneck_forward.1} parent=11 // pred_check_branch
        %302 = sbr.rel (%p300) target = $region36
      $region35: #{bottleneck_forward.1} parent=11 // pred_region
        _
      $region36: #{bottleneck_forward.1} parent=11 // pred_fallthru
        _
    $region12: #{bottleneck_forward.1} parent=5 // pred_fallthru
      _
    %p303 = scmp.lt.s32.totalorder %s22, 18
    // Predicated region
    $region37: #{bottleneck_forward.1} parent=5 // pred_check
      %p304 = pneg %p303
    $region38: #{bottleneck_forward.1} parent=5 // pred_check_branch
      %306 = sbr.rel (%p304) target = $region40
    $region39: #{bottleneck_forward.1} parent=5 // pred_region
      // Predicated region
      $region41: #{bottleneck_forward.1} parent=39 // pred_check
        %p307 = pneg %p58
      $region42: #{bottleneck_forward.1} parent=39 // pred_check_branch
        %309 = sbr.rel (%p307) target = $region44
      $region43: #{bottleneck_forward.1} parent=39 // pred_region
        %s310 = sld [smem:[#allocation5 + %s30]]
        %p311 = scmp.lt.s32.totalorder %s29, 1
        %s312 = scalar_select %p311, %s29, 1
        %p313 = scmp.lt.s32.totalorder %s310, 3
        %s314 = scalar_select %p313, %s310, 3
        %s315 = smul.addr %s314, 18
        %s316 = smul.addr %s312, 72
        %s317 = sadd.s32 %s315, %s316
        %s318 = smul.addr %s317, 4
        %s319 = scalar_lea.vmem %s1, %s318
        %s320 = sld [smem:[#allocation5 + %s30]]
      $region44: #{bottleneck_forward.1} parent=39 // pred_fallthru
        _
      // Predicated region
      $region45: #{bottleneck_forward.1} parent=39 // pred_check
        %p321 = pneg %p86
      $region46: #{bottleneck_forward.1} parent=39 // pred_check_branch
        %323 = sbr.rel (%p321) target = $region48
      $region47: #{bottleneck_forward.1} parent=39 // pred_region
        %s324 = sld [smem:[#allocation5 + %s30]]
        %p325 = scmp.lt.s32.totalorder %s324, 3
        %s326 = scalar_select %p325, %s324, 3
        %s327 = smul.addr %s326, 18
        %s328 = smul.addr %s327, 8
        %s329 = scalar_lea.vmem %s2, %s328
        %s330 = sld [smem:[#allocation5 + %s30]]
      $region48: #{bottleneck_forward.1} parent=39 // pred_fallthru
        _
      // Predicated region
      $region49: #{bottleneck_forward.1} parent=39 // pred_check
        %p331 = pneg %p154
      $region50: #{bottleneck_forward.1} parent=39 // pred_check_branch
        %333 = sbr.rel (%p331) target = $region52
      $region51: #{bottleneck_forward.1} parent=39 // pred_region
        %p334 = scmp.lt.s32.totalorder %s30, 8
        %s335 = scalar_select %p334, %s30, 8
        %s336 = smul.addr %s335, 16
        %s337 = smul.addr %s336, 4
        %s338 = scalar_lea.vmem %s5, %s337
      $region52: #{bottleneck_forward.1} parent=39 // pred_fallthru
        _
    $region40: #{bottleneck_forward.1} parent=5 // pred_fallthru
      _
    %p339 = scmp.le.s32.totalorder 1, %s22
    %p340 = scmp.lt.s32.totalorder %s22, 19
    %p341 = pnand %p339, %p340
    %p342 = pneg %p341
    // Predicated region
    $region53: #{bottleneck_forward.1} parent=5 // pred_check
      _
    $region54: #{bottleneck_forward.1} parent=5 // pred_check_branch
      %344 = sbr.rel (%p341) target = $region56
    $region55: #{bottleneck_forward.1} parent=5 // pred_region
      %s345 = ssub.s32 %s22, 1
      %s346 = sld [smem:[#allocation5 + %s32]]
      %p347 = scmp.lt.s32.totalorder %s31, 1
      %s348 = scalar_select %p347, %s31, 1
      %p349 = scmp.lt.s32.totalorder %s346, 3
      %s350 = scalar_select %p349, %s346, 3
      %s351 = smul.addr %s350, 18
      %s352 = smul.addr %s348, 72
      %s353 = sadd.s32 %s351, %s352
      %s354 = smul.addr %s353, 4
      %s355 = scalar_lea.vmem %s1, %s354
      %p356 = pneg %p64
      %p357 = pneg %p61
      %s358 = sld [smem:[#allocation5 + %s32]]
      %p359 = scmp.lt.s32.totalorder %s358, 3
      %s360 = scalar_select %p359, %s358, 3
      %s361 = smul.addr %s360, 18
      %s362 = smul.addr %s361, 8
      %s363 = scalar_lea.vmem %s2, %s362
      %p364 = pneg %p92
      %p365 = pneg %p89
      %p366 = pneg %p113
      %p367 = pneg %p110
      %p368 = pneg %p134
      %p369 = pneg %p131
      %p370 = scmp.lt.s32.totalorder %s32, 8
      %s371 = scalar_select %p370, %s32, 8
      %s372 = smul.addr %s371, 16
      %s373 = smul.addr %s372, 4
      %s374 = scalar_lea.vmem %s5, %s373
      %p375 = pneg %p160
      %p376 = pneg %p157
      %p377 = pneg %p181
      %p378 = pneg %p178
      %p379 = pneg %p202
      %p380 = pneg %p199
      %p381 = pneg %p223
      %p382 = pneg %p220
      %p383 = pneg %p244
      %p384 = pneg %p241
      %p385 = pneg %p270
      %p386 = pneg %p267
      %p387 = scmp.lt.s32.totalorder %s31, 1
      %s388 = scalar_select %p387, %s31, 1
      %s389 = smul.addr %s388, 8
      %s390 = smul.addr %s389, 4
      %s391 = scalar_lea.vmem %s10, %s390
      %s392 = sld [smem:[#allocation5 + %s32]]
      %p393 = scmp.lt.s32.totalorder %s31, 1
      %s394 = scalar_select %p393, %s31, 1
      %p395 = scmp.lt.s32.totalorder %s392, 3
      %s396 = scalar_select %p395, %s392, 3
      %s397 = smul.addr %s396, 18
      %s398 = smul.addr %s394, 72
      %s399 = sadd.s32 %s397, %s398
      %s400 = smul.addr %s399, 4
      %s401 = scalar_lea.vmem %s1, %s400
      %s402 = sld [smem:[#allocation5 + %s32]]
      %s403 = sld [smem:[#allocation5 + %s32]]
      %p404 = scmp.lt.s32.totalorder %s403, 3
      %s405 = scalar_select %p404, %s403, 3
      %s406 = smul.addr %s405, 18
      %s407 = smul.addr %s406, 8
      %s408 = scalar_lea.vmem %s2, %s407
      %s409 = sld [smem:[#allocation5 + %s32]]
      %p410 = scmp.lt.s32.totalorder %s32, 8
      %s411 = scalar_select %p410, %s32, 8
      %s412 = smul.addr %s411, 16
      %s413 = smul.addr %s412, 4
      %s414 = scalar_lea.vmem %s5, %s413
      %p415 = scmp.lt.s32.totalorder %s31, 1
      %s416 = scalar_select %p415, %s31, 1
      %s417 = smul.addr %s416, 8
      %s418 = smul.addr %s417, 4
      %s419 = scalar_lea.vmem %s10, %s418
      %s421 = sshra.s32 %s32, 7
      %s422 = sand.u32 %s32, 127
      %s423 = sadd.s32 %s421, 1
      %s424 = smul.u32 %s423, 128
      %s425 = sshra.s32 %s32, 7
      %s426 = sand.u32 %s32, 127
      %s427 = sadd.s32 %s424, %s426
      %s428 = sld [smem:[#allocation5 + %s427]]
      %s429 = sadd.s32 %s421, 2
      %s430 = smul.u32 %s429, 128
      %s431 = sadd.s32 %s430, %s426
      %s432 = sld [smem:[#allocation5 + %s431]]
      %s433 = sadd.s32 %s421, 3
      %s434 = smul.u32 %s433, 128
      %s435 = sadd.s32 %s434, %s426
      %s436 = sld [smem:[#allocation5 + %s435]]
      %p437 = scmp.eq.s32.totalorder %s436, 1
      // Predicated region
      $region57: #{bottleneck_forward.1} parent=55 // pred_check
        %p438 = pneg %p437
      $region58: #{bottleneck_forward.1} parent=55 // pred_check_branch
        %440 = sbr.rel (%p438) target = $region60
      $region59: #{bottleneck_forward.1} parent=55 // pred_region
        %v441 = vld [vmem:[%s401] sm:$0xf]
        %v442 = vld [vmem:[%s401 + $0x4] sm:$0xf]
        %v443 = vld [vmem:[%s401 + $0x8] sm:$0xf]
        %v444 = vld [vmem:[%s401 + $0xc] sm:$0xf]
        %v445 = vld [vmem:[%s401 + $0x10] sm:$0xf]
        %v446 = vld [vmem:[%s401 + $0x14] sm:$0xf]
        %v447 = vld [vmem:[%s401 + $0x18] sm:$0xf]
        %v448 = vld [vmem:[%s401 + $0x1c] sm:$0xf]
        %v449 = vld [vmem:[%s401 + $0x20] sm:$0xf]
        %v450 = vld [vmem:[%s401 + $0x24] sm:$0xf]
        %v451 = vld [vmem:[%s401 + $0x28] sm:$0xf]
        %v452 = vld [vmem:[%s401 + $0x2c] sm:$0xf]
        %v453 = vld [vmem:[%s401 + $0x30] sm:$0xf]
        %v454 = vld [vmem:[%s401 + $0x34] sm:$0xf]
        %v455 = vld [vmem:[%s401 + $0x38] sm:$0xf]
        %v456 = vld [vmem:[%s401 + $0x3c] sm:$0xf]
        %v457 = vld [vmem:[%s401 + $0x40] sm:$0xf]
        %v458 = vld [vmem:[%s401 + $0x44] sm:$0xf]
        %v459 = vld [vmem:[%s3] sm:$0xf]
        %v460 = vld [vmem:[%s3 + $0x4] sm:$0xf]
        %v461 = vld [vmem:[%s3 + $0x8] sm:$0xf]
        %v462 = vld [vmem:[%s3 + $0xc] sm:$0xf]
        %v463 = vld [vmem:[%s3 + $0x10] sm:$0xf]
        %v464 = vld [vmem:[%s3 + $0x14] sm:$0xf]
        %v465 = vld [vmem:[%s3 + $0x18] sm:$0xf]
        %v466 = vld [vmem:[%s3 + $0x1c] sm:$0xf]
        %v467 = vld [vmem:[%s3 + $0x20] sm:$0xf]
        %v468 = vld [vmem:[%s3 + $0x24] sm:$0xf]
        %v469 = vld [vmem:[%s3 + $0x28] sm:$0xf]
        %v470 = vld [vmem:[%s3 + $0x2c] sm:$0xf]
        %v471 = vld [vmem:[%s3 + $0x30] sm:$0xf]
        %v472 = vld [vmem:[%s3 + $0x34] sm:$0xf]
        %v473 = vld [vmem:[%s3 + $0x38] sm:$0xf]
        %v474 = vld [vmem:[%s3 + $0x3c] sm:$0xf]
        %v475 = vld [vmem:[%s4] sm:$0x1]
        %v477 = vlaneseq
        %v478 = vshrl.u32 %v477, 7
        %v479 = vsub.s32 0, %v478
        %v480 = vrot.slane %v475, %v479
        %v500 = vunpack.c.l.b16 %v441
        %v501 = vunpack.c.l.b16 %v442
        %v502 = vunpack.c.l.b16 %v443
        %v503 = vunpack.c.l.b16 %v444
        %v504 = vunpack.c.l.b16 %v445
        %v505 = vunpack.c.l.b16 %v446
        %v506 = vunpack.c.l.b16 %v447
        %v507 = vunpack.c.l.b16 %v448
        %v508 = vunpack.c.l.b16 %v449
        %v509 = vunpack.c.l.b16 %v450
        %v510 = vunpack.c.l.b16 %v451
        %v511 = vunpack.c.l.b16 %v452
        %v512 = vunpack.c.l.b16 %v453
        %v513 = vunpack.c.l.b16 %v454
        %v514 = vunpack.c.l.b16 %v455
        %v515 = vunpack.c.l.b16 %v456
        %v516 = vunpack.c.l.b16 %v457
        %v517 = vunpack.c.l.b16 %v458
        %v518 = vpack.c.b16 %v501, %v500
        %v519 = vpack.c.b16 %v503, %v502
        %v520 = vpack.c.b16 %v505, %v504
        %v521 = vpack.c.b16 %v507, %v506
        %v522 = vpack.c.b16 %v509, %v508
        %v523 = vpack.c.b16 %v511, %v510
        %v524 = vpack.c.b16 %v513, %v512
        %v525 = vpack.c.b16 %v515, %v514
        %v526 = vpack.c.b16 %v517, %v516
        %v552 = vunpack.c.l.b16 %v459
        %v553 = vunpack.c.l.b16 %v460
        %v554 = vunpack.c.l.b16 %v461
        %v555 = vunpack.c.l.b16 %v462
        %v556 = vunpack.c.l.b16 %v463
        %v557 = vunpack.c.l.b16 %v464
        %v558 = vunpack.c.l.b16 %v465
        %v559 = vunpack.c.l.b16 %v466
        %v560 = vunpack.c.l.b16 %v467
        %v561 = vunpack.c.l.b16 %v468
        %v562 = vunpack.c.l.b16 %v469
        %v563 = vunpack.c.l.b16 %v470
        %v564 = vunpack.c.l.b16 %v471
        %v565 = vunpack.c.l.b16 %v472
        %v566 = vunpack.c.l.b16 %v473
        %v567 = vunpack.c.l.b16 %v474
        %v568 = vpack.c.b16 %v553, %v552
        %v569 = vpack.c.b16 %v555, %v554
        %v570 = vpack.c.b16 %v557, %v556
        %v571 = vpack.c.b16 %v559, %v558
        %v572 = vpack.c.b16 %v561, %v560
        %v573 = vpack.c.b16 %v563, %v562
        %v574 = vpack.c.b16 %v565, %v564
        %v575 = vpack.c.b16 %v567, %v566
        %584 = vmatprep.subr.bf16.mxu0 0
        %585 = vmatpush1.bf16.msra.mxu0 %v568
        %586 = vmatprep.subr.bf16.mxu0 0
        %587 = vmatpush1.bf16.msra.mxu0 %v569
        %588 = vmatprep.subr.bf16.mxu0 0
        %589 = vmatpush1.bf16.msra.mxu0 %v570
        %590 = vmatprep.subr.bf16.mxu0 0
        %591 = vmatpush1.bf16.msra.mxu0 %v571
        %592 = vmatprep.subr.bf16.mxu0 0
        %593 = vmatpush1.bf16.msra.mxu0 %v572
        %594 = vmatprep.subr.bf16.mxu0 0
        %595 = vmatpush1.bf16.msra.mxu0 %v573
        %596 = vmatprep.subr.bf16.mxu0 0
        %597 = vmatpush1.bf16.msra.mxu0 %v574
        %598 = vmatprep.subr.bf16.mxu0 0
        %599 = vmatpush1.bf16.msra.mxu0 %v575
        %600 = vmatprep.subr.bf16.mxu0 0
        %601 = vmatpush1.bf16.msra.mxu0 0
        %602 = vmatprep.subr.bf16.mxu0 0
        %603 = vmatpush1.bf16.msra.mxu0 0
        %604 = vmatprep.subr.bf16.mxu0 0
        %605 = vmatpush1.bf16.msra.mxu0 0
        %606 = vmatprep.subr.bf16.mxu0 0
        %607 = vmatpush1.bf16.msra.mxu0 0
        %608 = vmatprep.subr.bf16.mxu0 0
        %609 = vmatpush1.bf16.msra.mxu0 0
        %610 = vmatprep.subr.bf16.mxu0 0
        %611 = vmatpush1.bf16.msra.mxu0 0
        %612 = vmatprep.subr.bf16.mxu0 0
        %613 = vmatpush1.bf16.msra.mxu0 0
        %614 = vmatprep.subr.bf16.mxu0 0
        %615 = vmatpush1.bf16.msra.mxu0 0
        %616 = vmatprep.mubr.bf16.mxu0 0
        %617 = vmatmul.mubr.bf16.gmra.mrb[0].mxu0 %v518
        %v618 = vpop.f32.mrb[0].mxu0
        %v619 = vadd.f32 %v480, %v618
        %v620 = vpop.f32.mrb[0].mxu0
        %v621 = vpop.f32.mrb[0].mxu0
        %v622 = vadd.f32 %v480, %v621
        %v623 = vpop.f32.mrb[0].mxu0
        %624 = vmatprep.mubr.bf16.mxu0 0
        %625 = vmatmul.mubr.bf16.gmra.mrb[0].mxu0 %v519
        %v626 = vpop.f32.mrb[0].mxu0
        %v627 = vadd.f32 %v480, %v626
        %v628 = vpop.f32.mrb[0].mxu0
        %v629 = vpop.f32.mrb[0].mxu0
        %v630 = vadd.f32 %v480, %v629
        %v631 = vpop.f32.mrb[0].mxu0
        %632 = vmatprep.mubr.bf16.mxu0 0
        %633 = vmatmul.mubr.bf16.gmra.mrb[0].mxu0 %v520
        %v634 = vpop.f32.mrb[0].mxu0
        %v635 = vadd.f32 %v480, %v634
        %v636 = vpop.f32.mrb[0].mxu0
        %v637 = vpop.f32.mrb[0].mxu0
        %v638 = vadd.f32 %v480, %v637
        %v639 = vpop.f32.mrb[0].mxu0
        %640 = vmatprep.mubr.bf16.mxu0 0
        %641 = vmatmul.mubr.bf16.gmra.mrb[0].mxu0 %v521
        %v642 = vpop.f32.mrb[0].mxu0
        %v643 = vadd.f32 %v480, %v642
        %v644 = vpop.f32.mrb[0].mxu0
        %v645 = vpop.f32.mrb[0].mxu0
        %v646 = vadd.f32 %v480, %v645
        %v647 = vpop.f32.mrb[0].mxu0
        %648 = vmatprep.mubr.bf16.mxu0 0
        %649 = vmatmul.mubr.bf16.gmra.mrb[0].mxu0 %v522
        %v650 = vpop.f32.mrb[0].mxu0
        %v651 = vadd.f32 %v480, %v650
        %v652 = vpop.f32.mrb[0].mxu0
        %v653 = vpop.f32.mrb[0].mxu0
        %v654 = vadd.f32 %v480, %v653
        %v655 = vpop.f32.mrb[0].mxu0
        %656 = vmatprep.mubr.bf16.mxu0 0
        %657 = vmatmul.mubr.bf16.gmra.mrb[0].mxu0 %v523
        %v658 = vpop.f32.mrb[0].mxu0
        %v659 = vadd.f32 %v480, %v658
        %v660 = vpop.f32.mrb[0].mxu0
        %v661 = vpop.f32.mrb[0].mxu0
        %v662 = vadd.f32 %v480, %v661
        %v663 = vpop.f32.mrb[0].mxu0
        %664 = vmatprep.mubr.bf16.mxu0 0
        %665 = vmatmul.mubr.bf16.gmra.mrb[0].mxu0 %v524
        %v666 = vpop.f32.mrb[0].mxu0
        %v667 = vadd.f32 %v480, %v666
        %v668 = vpop.f32.mrb[0].mxu0
        %v669 = vpop.f32.mrb[0].mxu0
        %v670 = vadd.f32 %v480, %v669
        %v671 = vpop.f32.mrb[0].mxu0
        %672 = vmatprep.mubr.bf16.mxu0 0
        %673 = vmatmul.mubr.bf16.gmra.mrb[0].mxu0 %v525
        %v674 = vpop.f32.mrb[0].mxu0
        %v675 = vadd.f32 %v480, %v674
        %v676 = vpop.f32.mrb[0].mxu0
        %v677 = vpop.f32.mrb[0].mxu0
        %v678 = vadd.f32 %v480, %v677
        %v679 = vpop.f32.mrb[0].mxu0
        %680 = vmatprep.mubr.bf16.mxu0 0
        %681 = vmatmul.mubr.bf16.gmra.mrb[0].mxu0 %v526
        %v682 = vpop.f32.mrb[0].mxu0
        %v683 = vadd.f32 %v480, %v682
        %v684 = vpop.f32.mrb[0].mxu0
        %v685 = vpop.f32.mrb[0].mxu0
        %v686 = vadd.f32 %v480, %v685
        %v687 = vpop.f32.mrb[0].mxu0
        %688 = vdwg.mxu0
        %v689 = vmax.f32 %v619, 0.0
        %v690 = vmax.f32 %v622, 0.0
        %v691 = vmax.f32 %v627, 0.0
        %v692 = vmax.f32 %v630, 0.0
        %v693 = vmax.f32 %v635, 0.0
        %v694 = vmax.f32 %v638, 0.0
        %v695 = vmax.f32 %v643, 0.0
        %v696 = vmax.f32 %v646, 0.0
        %v697 = vmax.f32 %v651, 0.0
        %v698 = vmax.f32 %v654, 0.0
        %v699 = vmax.f32 %v659, 0.0
        %v700 = vmax.f32 %v662, 0.0
        %v701 = vmax.f32 %v667, 0.0
        %v702 = vmax.f32 %v670, 0.0
        %v703 = vmax.f32 %v675, 0.0
        %v704 = vmax.f32 %v678, 0.0
        %v705 = vmax.f32 %v683, 0.0
        %v706 = vmax.f32 %v686, 0.0
        %v707 = vld [vmem:[%s408] sm:$0xff]
        %v708 = vld [vmem:[%s408 + $0x8] sm:$0xff]
        %v709 = vld [vmem:[%s408 + $0x10] sm:$0xff]
        %v710 = vld [vmem:[%s408 + $0x18] sm:$0xff]
        %v711 = vld [vmem:[%s408 + $0x20] sm:$0xff]
        %v712 = vld [vmem:[%s408 + $0x28] sm:$0xff]
        %v713 = vld [vmem:[%s408 + $0x30] sm:$0xff]
        %v714 = vld [vmem:[%s408 + $0x38] sm:$0xff]
        %v715 = vld [vmem:[%s408 + $0x40] sm:$0xff]
        %v716 = vld [vmem:[%s408 + $0x48] sm:$0xff]
        %v717 = vld [vmem:[%s408 + $0x50] sm:$0xff]
        %v718 = vld [vmem:[%s408 + $0x58] sm:$0xff]
        %v719 = vld [vmem:[%s408 + $0x60] sm:$0xff]
        %v720 = vld [vmem:[%s408 + $0x68] sm:$0xff]
        %v721 = vld [vmem:[%s408 + $0x70] sm:$0xff]
        %v722 = vld [vmem:[%s408 + $0x78] sm:$0xff]
        %v723 = vld [vmem:[%s408 + $0x80] sm:$0xff]
        %v724 = vld [vmem:[%s408 + $0x88] sm:$0xff]
        %726 = vset.pattern.permute.xlu0 0
        %727 = vperm.xlu0 %726, %v707
        %v728 = vpop.permute.xlu0 %727
        %731 = vset.pattern.permute.xlu0 0
        %732 = vperm.xlu0 %731, %v708
        %v733 = vpop.permute.xlu0 %732
        %736 = vset.pattern.permute.xlu0 0
        %737 = vperm.xlu0 %736, %v709
        %v738 = vpop.permute.xlu0 %737
        %741 = vset.pattern.permute.xlu0 0
        %742 = vperm.xlu0 %741, %v710
        %v743 = vpop.permute.xlu0 %742
        %746 = vset.pattern.permute.xlu0 0
        %747 = vperm.xlu0 %746, %v711
        %v748 = vpop.permute.xlu0 %747
        %751 = vset.pattern.permute.xlu0 0
        %752 = vperm.xlu0 %751, %v712
        %v753 = vpop.permute.xlu0 %752
        %756 = vset.pattern.permute.xlu0 0
        %757 = vperm.xlu0 %756, %v713
        %v758 = vpop.permute.xlu0 %757
        %761 = vset.pattern.permute.xlu0 0
        %762 = vperm.xlu0 %761, %v714
        %v763 = vpop.permute.xlu0 %762
        %766 = vset.pattern.permute.xlu0 0
        %767 = vperm.xlu0 %766, %v715
        %v768 = vpop.permute.xlu0 %767
        %771 = vset.pattern.permute.xlu0 0
        %772 = vperm.xlu0 %771, %v716
        %v773 = vpop.permute.xlu0 %772
        %776 = vset.pattern.permute.xlu0 0
        %777 = vperm.xlu0 %776, %v717
        %v778 = vpop.permute.xlu0 %777
        %781 = vset.pattern.permute.xlu0 0
        %782 = vperm.xlu0 %781, %v718
        %v783 = vpop.permute.xlu0 %782
        %786 = vset.pattern.permute.xlu0 0
        %787 = vperm.xlu0 %786, %v719
        %v788 = vpop.permute.xlu0 %787
        %791 = vset.pattern.permute.xlu0 0
        %792 = vperm.xlu0 %791, %v720
        %v793 = vpop.permute.xlu0 %792
        %796 = vset.pattern.permute.xlu0 0
        %797 = vperm.xlu0 %796, %v721
        %v798 = vpop.permute.xlu0 %797
        %801 = vset.pattern.permute.xlu0 0
        %802 = vperm.xlu0 %801, %v722
        %v803 = vpop.permute.xlu0 %802
        %806 = vset.pattern.permute.xlu0 0
        %807 = vperm.xlu0 %806, %v723
        %v808 = vpop.permute.xlu0 %807
        %811 = vset.pattern.permute.xlu0 0
        %812 = vperm.xlu0 %811, %v724
        %v813 = vpop.permute.xlu0 %812
        %v815 = vmul.f32 %v689, %v728
        %v816 = vmul.f32 %v690, %v733
        %v817 = vmul.f32 %v691, %v738
        %v818 = vmul.f32 %v692, %v743
        %v819 = vmul.f32 %v693, %v748
        %v820 = vmul.f32 %v694, %v753
        %v821 = vmul.f32 %v695, %v758
        %v822 = vmul.f32 %v696, %v763
        %v823 = vmul.f32 %v697, %v768
        %v824 = vmul.f32 %v698, %v773
        %v825 = vmul.f32 %v699, %v778
        %v826 = vmul.f32 %v700, %v783
        %v827 = vmul.f32 %v701, %v788
        %v828 = vmul.f32 %v702, %v793
        %v829 = vmul.f32 %v703, %v798
        %v830 = vmul.f32 %v704, %v803
        %v831 = vmul.f32 %v705, %v808
        %v832 = vmul.f32 %v706, %v813
        %v833 = vpack.c.bf16 %v816, %v815
        %v834 = vpack.c.bf16 %v818, %v817
        %v835 = vpack.c.bf16 %v820, %v819
        %v836 = vpack.c.bf16 %v822, %v821
        %v837 = vpack.c.bf16 %v824, %v823
        %v838 = vpack.c.bf16 %v826, %v825
        %v839 = vpack.c.bf16 %v828, %v827
        %v840 = vpack.c.bf16 %v830, %v829
        %v841 = vpack.c.bf16 %v832, %v831
        %842 = vst [vmem:[#allocation2] sm:$0xff] %v833
        %843 = vst [vmem:[#allocation2 + $0x8] sm:$0xff] %v834
        %844 = vst [vmem:[#allocation2 + $0x10] sm:$0xff] %v835
        %845 = vst [vmem:[#allocation2 + $0x18] sm:$0xff] %v836
        %846 = vst [vmem:[#allocation2 + $0x20] sm:$0xff] %v837
        %847 = vst [vmem:[#allocation2 + $0x28] sm:$0xff] %v838
        %848 = vst [vmem:[#allocation2 + $0x30] sm:$0xff] %v839
        %849 = vst [vmem:[#allocation2 + $0x38] sm:$0xff] %v840
        %850 = vst [vmem:[#allocation2 + $0x40] sm:$0xff] %v841
        %vm851 = vsmask.f32 7424
        %v853 = vshrl.u32 %v833, 16
        %v855 = vshll.u32 %v833, 16
        %v857 = vrot.slane %v855, 1
        %v858 = vor.u32 %v853, %v857
        %v860 = vshll.u32 %v834, 16
        %v862 = vrot.slane %v860, 1
        %v863 = vsel %vm851, %v858, %v862
        %v864 = vshrl.u32 %v834, 16
        %v866 = vor.u32 %v864, %v862
        %v868 = vshll.u32 %v835, 16
        %v870 = vrot.slane %v868, 1
        %v871 = vsel %vm851, %v866, %v870
        %v872 = vshrl.u32 %v835, 16
        %v874 = vor.u32 %v872, %v870
        %v876 = vshll.u32 %v836, 16
        %v878 = vrot.slane %v876, 1
        %v879 = vsel %vm851, %v874, %v878
        %v880 = vshrl.u32 %v836, 16
        %v882 = vor.u32 %v880, %v878
        %v884 = vshll.u32 %v837, 16
        %v886 = vrot.slane %v884, 1
        %v887 = vsel %vm851, %v882, %v886
        %v888 = vshrl.u32 %v837, 16
        %v890 = vor.u32 %v888, %v886
        %v892 = vshll.u32 %v838, 16
        %v894 = vrot.slane %v892, 1
        %v895 = vsel %vm851, %v890, %v894
        %v896 = vshrl.u32 %v838, 16
        %v898 = vor.u32 %v896, %v894
        %v900 = vshll.u32 %v839, 16
        %v902 = vrot.slane %v900, 1
        %v903 = vsel %vm851, %v898, %v902
        %v904 = vshrl.u32 %v839, 16
        %v906 = vor.u32 %v904, %v902
        %v908 = vshll.u32 %v840, 16
        %v910 = vrot.slane %v908, 1
        %v911 = vsel %vm851, %v906, %v910
        %v912 = vshrl.u32 %v840, 16
        %v914 = vor.u32 %v912, %v910
        %v916 = vshll.u32 %v841, 16
        %v918 = vrot.slane %v916, 1
        %v919 = vsel %vm851, %v914, %v918
        %v920 = vshrl.u32 %v841, 16
        %v922 = vor.u32 %v920, %v918
        %932 = vst [vmem:[#allocation2 + $0x48] sm:$0xff] %v863
        %933 = vst [vmem:[#allocation2 + $0x50] sm:$0xff] %v871
        %934 = vst [vmem:[#allocation2 + $0x58] sm:$0xff] %v879
        %935 = vst [vmem:[#allocation2 + $0x60] sm:$0xff] %v887
        %936 = vst [vmem:[#allocation2 + $0x68] sm:$0xff] %v895
        %937 = vst [vmem:[#allocation2 + $0x70] sm:$0xff] %v903
        %938 = vst [vmem:[#allocation2 + $0x78] sm:$0xff] %v911
        %939 = vst [vmem:[#allocation2 + $0x80] sm:$0xff] %v919
        %vm940 = vcmask 1047552
        %vm941 = vmand %vm940, %vm851
        %v942 = vld [vmem:[#allocation2 + $0x88] sm:$0xff]
        %v943 = vsel %vm941, %v922, %v942
        %944 = vst [vmem:[#allocation2 + $0x88] sm:$0xff] %v943
      $region60: #{bottleneck_forward.1} parent=55 // pred_fallthru
        _
      %s945 = smul.u32 %s432, 144
      %s946 = smul.u32 %s428, 16
      %s947 = sadd.s32 %s945, %s946
      %s948 = sshra.s32 %s947, 4
      %s949 = sand.u32 %s947, 15
      %s950 = smul.addr %s948, 8
      %s951 = scalar_lea.vmem [#allocation2], %s950
      %v952 = vld [vmem:[%s951] sm:$0xff]
      %v953 = vld [vmem:[%s951 + $0x8] sm:$0xff]
      %v954 = vld [vmem:[%s951 + $0x10] sm:$0xff]
      %v955 = vld [vmem:[%s951 + $0x18] sm:$0xff]
      %v956 = vld [vmem:[%s951 + $0x20] sm:$0xff]
      %v957 = vld [vmem:[%s951 + $0x28] sm:$0xff]
      %v958 = vld [vmem:[%s951 + $0x30] sm:$0xff]
      %v959 = vld [vmem:[%s951 + $0x38] sm:$0xff]
      %v960 = vld [vmem:[%s414] sm:$0xf]
      %v961 = vld [vmem:[%s414 + $0x4] sm:$0xf]
      %v962 = vld [vmem:[%s414 + $0x8] sm:$0xf]
      %v963 = vld [vmem:[%s414 + $0xc] sm:$0xf]
      %v964 = vld [vmem:[%s414 + $0x10] sm:$0xf]
      %v965 = vld [vmem:[%s414 + $0x14] sm:$0xf]
      %v966 = vld [vmem:[%s414 + $0x18] sm:$0xf]
      %v967 = vld [vmem:[%s414 + $0x1c] sm:$0xf]
      %v968 = vld [vmem:[%s414 + $0x20] sm:$0xf]
      %v969 = vld [vmem:[%s414 + $0x24] sm:$0xf]
      %v970 = vld [vmem:[%s414 + $0x28] sm:$0xf]
      %v971 = vld [vmem:[%s414 + $0x2c] sm:$0xf]
      %v972 = vld [vmem:[%s414 + $0x30] sm:$0xf]
      %v973 = vld [vmem:[%s414 + $0x34] sm:$0xf]
      %v974 = vld [vmem:[%s414 + $0x38] sm:$0xf]
      %v975 = vld [vmem:[%s414 + $0x3c] sm:$0xf]
      %v992 = vunpack.c.l.b16 %v960
      %v993 = vunpack.c.l.b16 %v961
      %v994 = vunpack.c.l.b16 %v962
      %v995 = vunpack.c.l.b16 %v963
      %v996 = vunpack.c.l.b16 %v964
      %v997 = vunpack.c.l.b16 %v965
      %v998 = vunpack.c.l.b16 %v966
      %v999 = vunpack.c.l.b16 %v967
      %v1000 = vunpack.c.l.b16 %v968
      %v1001 = vunpack.c.l.b16 %v969
      %v1002 = vunpack.c.l.b16 %v970
      %v1003 = vunpack.c.l.b16 %v971
      %v1004 = vunpack.c.l.b16 %v972
      %v1005 = vunpack.c.l.b16 %v973
      %v1006 = vunpack.c.l.b16 %v974
      %v1007 = vunpack.c.l.b16 %v975
      %v1008 = vpack.c.b16 %v993, %v992
      %v1009 = vpack.c.b16 %v995, %v994
      %v1010 = vpack.c.b16 %v997, %v996
      %v1011 = vpack.c.b16 %v999, %v998
      %v1012 = vpack.c.b16 %v1001, %v1000
      %v1013 = vpack.c.b16 %v1003, %v1002
      %v1014 = vpack.c.b16 %v1005, %v1004
      %v1015 = vpack.c.b16 %v1007, %v1006
      %1024 = vmatprep.subr.bf16.mxu0 0
      %1025 = vmatpush1.bf16.msra.mxu0 %v1008
      %1026 = vmatprep.subr.bf16.mxu0 0
      %1027 = vmatpush1.bf16.msra.mxu0 %v1009
      %1028 = vmatprep.subr.bf16.mxu0 0
      %1029 = vmatpush1.bf16.msra.mxu0 %v1010
      %1030 = vmatprep.subr.bf16.mxu0 0
      %1031 = vmatpush1.bf16.msra.mxu0 %v1011
      %1032 = vmatprep.subr.bf16.mxu0 0
      %1033 = vmatpush1.bf16.msra.mxu0 %v1012
      %1034 = vmatprep.subr.bf16.mxu0 0
      %1035 = vmatpush1.bf16.msra.mxu0 %v1013
      %1036 = vmatprep.subr.bf16.mxu0 0
      %1037 = vmatpush1.bf16.msra.mxu0 %v1014
      %1038 = vmatprep.subr.bf16.mxu0 0
      %1039 = vmatpush1.bf16.msra.mxu0 %v1015
      %1040 = vmatprep.subr.bf16.mxu0 0
      %1041 = vmatpush1.bf16.msra.mxu0 0
      %1042 = vmatprep.subr.bf16.mxu0 0
      %1043 = vmatpush1.bf16.msra.mxu0 0
      %1044 = vmatprep.subr.bf16.mxu0 0
      %1045 = vmatpush1.bf16.msra.mxu0 0
      %1046 = vmatprep.subr.bf16.mxu0 0
      %1047 = vmatpush1.bf16.msra.mxu0 0
      %1048 = vmatprep.subr.bf16.mxu0 0
      %1049 = vmatpush1.bf16.msra.mxu0 0
      %1050 = vmatprep.subr.bf16.mxu0 0
      %1051 = vmatpush1.bf16.msra.mxu0 0
      %1052 = vmatprep.subr.bf16.mxu0 0
      %1053 = vmatpush1.bf16.msra.mxu0 0
      %1054 = vmatprep.subr.bf16.mxu0 0
      %1055 = vmatpush1.bf16.msra.mxu0 0
      %1056 = vmatprep.mubr.bf16.mxu0 0
      %1057 = vmatmul.mubr.bf16.gmra.mrb[0].mxu0 %v952
      %v1058 = vpop.f32.mrb[0].mxu0
      %v1059 = vadd.f32 0.0, %v1058
      %v1060 = vpop.f32.mrb[0].mxu0
      %v1061 = vpop.f32.mrb[0].mxu0
      %v1062 = vadd.f32 0.0, %v1061
      %v1063 = vpop.f32.mrb[0].mxu0
      %1064 = vmatprep.mubr.bf16.mxu0 0
      %1065 = vmatmul.mubr.bf16.gmra.mrb[0].mxu0 %v953
      %v1066 = vpop.f32.mrb[0].mxu0
      %v1067 = vadd.f32 0.0, %v1066
      %v1068 = vpop.f32.mrb[0].mxu0
      %v1069 = vpop.f32.mrb[0].mxu0
      %v1070 = vadd.f32 0.0, %v1069
      %v1071 = vpop.f32.mrb[0].mxu0
      %1072 = vmatprep.mubr.bf16.mxu0 0
      %1073 = vmatmul.mubr.bf16.gmra.mrb[0].mxu0 %v954
      %v1074 = vpop.f32.mrb[0].mxu0
      %v1075 = vadd.f32 0.0, %v1074
      %v1076 = vpop.f32.mrb[0].mxu0
      %v1077 = vpop.f32.mrb[0].mxu0
      %v1078 = vadd.f32 0.0, %v1077
      %v1079 = vpop.f32.mrb[0].mxu0
      %1080 = vmatprep.mubr.bf16.mxu0 0
      %1081 = vmatmul.mubr.bf16.gmra.mrb[0].mxu0 %v955
      %v1082 = vpop.f32.mrb[0].mxu0
      %v1083 = vadd.f32 0.0, %v1082
      %v1084 = vpop.f32.mrb[0].mxu0
      %v1085 = vpop.f32.mrb[0].mxu0
      %v1086 = vadd.f32 0.0, %v1085
      %v1087 = vpop.f32.mrb[0].mxu0
      %1088 = vmatprep.mubr.bf16.mxu0 0
      %1089 = vmatmul.mubr.bf16.gmra.mrb[0].mxu0 %v956
      %v1090 = vpop.f32.mrb[0].mxu0
      %v1091 = vadd.f32 0.0, %v1090
      %v1092 = vpop.f32.mrb[0].mxu0
      %v1093 = vpop.f32.mrb[0].mxu0
      %v1094 = vadd.f32 0.0, %v1093
      %v1095 = vpop.f32.mrb[0].mxu0
      %1096 = vmatprep.mubr.bf16.mxu0 0
      %1097 = vmatmul.mubr.bf16.gmra.mrb[0].mxu0 %v957
      %v1098 = vpop.f32.mrb[0].mxu0
      %v1099 = vadd.f32 0.0, %v1098
      %v1100 = vpop.f32.mrb[0].mxu0
      %v1101 = vpop.f32.mrb[0].mxu0
      %v1102 = vadd.f32 0.0, %v1101
      %v1103 = vpop.f32.mrb[0].mxu0
      %1104 = vmatprep.mubr.bf16.mxu0 0
      %1105 = vmatmul.mubr.bf16.gmra.mrb[0].mxu0 %v958
      %v1106 = vpop.f32.mrb[0].mxu0
      %v1107 = vadd.f32 0.0, %v1106
      %v1108 = vpop.f32.mrb[0].mxu0
      %v1109 = vpop.f32.mrb[0].mxu0
      %v1110 = vadd.f32 0.0, %v1109
      %v1111 = vpop.f32.mrb[0].mxu0
      %1112 = vmatprep.mubr.bf16.mxu0 0
      %1113 = vmatmul.mubr.bf16.gmra.mrb[0].mxu0 %v959
      %v1114 = vpop.f32.mrb[0].mxu0
      %v1115 = vadd.f32 0.0, %v1114
      %v1116 = vpop.f32.mrb[0].mxu0
      %v1117 = vpop.f32.mrb[0].mxu0
      %v1118 = vadd.f32 0.0, %v1117
      %v1119 = vpop.f32.mrb[0].mxu0
      %1120 = vdwg.mxu0
      %p1121 = scmp.eq.s32.totalorder %s32, 0
      // Predicated region
      $region61: #{bottleneck_forward.1} parent=55 // pred_check
        %p1122 = pneg %p1121
      $region62: #{bottleneck_forward.1} parent=55 // pred_check_branch
        %1124 = sbr.rel (%p1122) target = $region64
      $region63: #{bottleneck_forward.1} parent=55 // pred_region
        %1125 = vst [vmem:[#allocation3] sm:$0xff] %v1059
        %1126 = vst [vmem:[#allocation3 + $0x8] sm:$0xff] %v1062
        %1127 = vst [vmem:[#allocation3 + $0x10] sm:$0xff] %v1067
        %1128 = vst [vmem:[#allocation3 + $0x18] sm:$0xff] %v1070
        %1129 = vst [vmem:[#allocation3 + $0x20] sm:$0xff] %v1075
        %1130 = vst [vmem:[#allocation3 + $0x28] sm:$0xff] %v1078
        %1131 = vst [vmem:[#allocation3 + $0x30] sm:$0xff] %v1083
        %1132 = vst [vmem:[#allocation3 + $0x38] sm:$0xff] %v1086
        %1133 = vst [vmem:[#allocation3 + $0x40] sm:$0xff] %v1091
        %1134 = vst [vmem:[#allocation3 + $0x48] sm:$0xff] %v1094
        %1135 = vst [vmem:[#allocation3 + $0x50] sm:$0xff] %v1099
        %1136 = vst [vmem:[#allocation3 + $0x58] sm:$0xff] %v1102
        %1137 = vst [vmem:[#allocation3 + $0x60] sm:$0xff] %v1107
        %1138 = vst [vmem:[#allocation3 + $0x68] sm:$0xff] %v1110
        %1139 = vst [vmem:[#allocation3 + $0x70] sm:$0xff] %v1115
        %1140 = vst [vmem:[#allocation3 + $0x78] sm:$0xff] %v1118
      $region64: #{bottleneck_forward.1} parent=55 // pred_fallthru
        _
      %p1141 = scmp.gt.s32.totalorder %s32, 0
      // Predicated region
      $region65: #{bottleneck_forward.1} parent=55 // pred_check
        %p1142 = pneg %p1141
      $region66: #{bottleneck_forward.1} parent=55 // pred_check_branch
        %1144 = sbr.rel (%p1142) target = $region68
      $region67: #{bottleneck_forward.1} parent=55 // pred_region
        %v1145 = vld [vmem:[#allocation3] sm:$0xff]
        %v1146 = vld [vmem:[#allocation3 + $0x8] sm:$0xff]
        %v1147 = vld [vmem:[#allocation3 + $0x10] sm:$0xff]
        %v1148 = vld [vmem:[#allocation3 + $0x18] sm:$0xff]
        %v1149 = vld [vmem:[#allocation3 + $0x20] sm:$0xff]
        %v1150 = vld [vmem:[#allocation3 + $0x28] sm:$0xff]
        %v1151 = vld [vmem:[#allocation3 + $0x30] sm:$0xff]
        %v1152 = vld [vmem:[#allocation3 + $0x38] sm:$0xff]
        %v1153 = vld [vmem:[#allocation3 + $0x40] sm:$0xff]
        %v1154 = vld [vmem:[#allocation3 + $0x48] sm:$0xff]
        %v1155 = vld [vmem:[#allocation3 + $0x50] sm:$0xff]
        %v1156 = vld [vmem:[#allocation3 + $0x58] sm:$0xff]
        %v1157 = vld [vmem:[#allocation3 + $0x60] sm:$0xff]
        %v1158 = vld [vmem:[#allocation3 + $0x68] sm:$0xff]
        %v1159 = vld [vmem:[#allocation3 + $0x70] sm:$0xff]
        %v1160 = vld [vmem:[#allocation3 + $0x78] sm:$0xff]
        %v1161 = vadd.f32 %v1145, %v1059
        %v1162 = vadd.f32 %v1146, %v1062
        %v1163 = vadd.f32 %v1147, %v1067
        %v1164 = vadd.f32 %v1148, %v1070
        %v1165 = vadd.f32 %v1149, %v1075
        %v1166 = vadd.f32 %v1150, %v1078
        %v1167 = vadd.f32 %v1151, %v1083
        %v1168 = vadd.f32 %v1152, %v1086
        %v1169 = vadd.f32 %v1153, %v1091
        %v1170 = vadd.f32 %v1154, %v1094
        %v1171 = vadd.f32 %v1155, %v1099
        %v1172 = vadd.f32 %v1156, %v1102
        %v1173 = vadd.f32 %v1157, %v1107
        %v1174 = vadd.f32 %v1158, %v1110
        %v1175 = vadd.f32 %v1159, %v1115
        %v1176 = vadd.f32 %v1160, %v1118
        %1177 = vst [vmem:[#allocation3] sm:$0xff] %v1161
        %1178 = vst [vmem:[#allocation3 + $0x8] sm:$0xff] %v1162
        %1179 = vst [vmem:[#allocation3 + $0x10] sm:$0xff] %v1163
        %1180 = vst [vmem:[#allocation3 + $0x18] sm:$0xff] %v1164
        %1181 = vst [vmem:[#allocation3 + $0x20] sm:$0xff] %v1165
        %1182 = vst [vmem:[#allocation3 + $0x28] sm:$0xff] %v1166
        %1183 = vst [vmem:[#allocation3 + $0x30] sm:$0xff] %v1167
        %1184 = vst [vmem:[#allocation3 + $0x38] sm:$0xff] %v1168
        %1185 = vst [vmem:[#allocation3 + $0x40] sm:$0xff] %v1169
        %1186 = vst [vmem:[#allocation3 + $0x48] sm:$0xff] %v1170
        %1187 = vst [vmem:[#allocation3 + $0x50] sm:$0xff] %v1171
        %1188 = vst [vmem:[#allocation3 + $0x58] sm:$0xff] %v1172
        %1189 = vst [vmem:[#allocation3 + $0x60] sm:$0xff] %v1173
        %1190 = vst [vmem:[#allocation3 + $0x68] sm:$0xff] %v1174
        %1191 = vst [vmem:[#allocation3 + $0x70] sm:$0xff] %v1175
        %1192 = vst [vmem:[#allocation3 + $0x78] sm:$0xff] %v1176
      $region68: #{bottleneck_forward.1} parent=55 // pred_fallthru
        _
      %p1193 = scmp.eq.s32.totalorder %s32, 8
      // Predicated region
      $region69: #{bottleneck_forward.1} parent=55 // pred_check
        %p1194 = pneg %p1193
      $region70: #{bottleneck_forward.1} parent=55 // pred_check_branch
        %1196 = sbr.rel (%p1194) target = $region72
      $region71: #{bottleneck_forward.1} parent=55 // pred_region
        %v1197 = vld [vmem:[#allocation3] sm:$0xff]
        %v1198 = vld [vmem:[#allocation3 + $0x8] sm:$0xff]
        %v1199 = vld [vmem:[#allocation3 + $0x10] sm:$0xff]
        %v1200 = vld [vmem:[#allocation3 + $0x18] sm:$0xff]
        %v1201 = vld [vmem:[#allocation3 + $0x20] sm:$0xff]
        %v1202 = vld [vmem:[#allocation3 + $0x28] sm:$0xff]
        %v1203 = vld [vmem:[#allocation3 + $0x30] sm:$0xff]
        %v1204 = vld [vmem:[#allocation3 + $0x38] sm:$0xff]
        %v1205 = vld [vmem:[#allocation3 + $0x40] sm:$0xff]
        %v1206 = vld [vmem:[#allocation3 + $0x48] sm:$0xff]
        %v1207 = vld [vmem:[#allocation3 + $0x50] sm:$0xff]
        %v1208 = vld [vmem:[#allocation3 + $0x58] sm:$0xff]
        %v1209 = vld [vmem:[#allocation3 + $0x60] sm:$0xff]
        %v1210 = vld [vmem:[#allocation3 + $0x68] sm:$0xff]
        %v1211 = vld [vmem:[#allocation3 + $0x70] sm:$0xff]
        %v1212 = vld [vmem:[#allocation3 + $0x78] sm:$0xff]
        %v1213 = vld [vmem:[%s6] sm:$0x1]
        %v1215 = vlaneseq
        %v1216 = vshrl.u32 %v1215, 7
        %v1217 = vsub.s32 0, %v1216
        %v1218 = vrot.slane %v1213, %v1217
        %v1220 = vadd.f32 %v1197, %v1218
        %v1221 = vadd.f32 %v1198, %v1218
        %v1222 = vadd.f32 %v1199, %v1218
        %v1223 = vadd.f32 %v1200, %v1218
        %v1224 = vadd.f32 %v1201, %v1218
        %v1225 = vadd.f32 %v1202, %v1218
        %v1226 = vadd.f32 %v1203, %v1218
        %v1227 = vadd.f32 %v1204, %v1218
        %v1228 = vadd.f32 %v1205, %v1218
        %v1229 = vadd.f32 %v1206, %v1218
        %v1230 = vadd.f32 %v1207, %v1218
        %v1231 = vadd.f32 %v1208, %v1218
        %v1232 = vadd.f32 %v1209, %v1218
        %v1233 = vadd.f32 %v1210, %v1218
        %v1234 = vadd.f32 %v1211, %v1218
        %v1235 = vadd.f32 %v1212, %v1218
        %v1236 = vmax.f32 %v1220, 0.0
        %v1237 = vmax.f32 %v1221, 0.0
        %v1238 = vmax.f32 %v1222, 0.0
        %v1239 = vmax.f32 %v1223, 0.0
        %v1240 = vmax.f32 %v1224, 0.0
        %v1241 = vmax.f32 %v1225, 0.0
        %v1242 = vmax.f32 %v1226, 0.0
        %v1243 = vmax.f32 %v1227, 0.0
        %v1244 = vmax.f32 %v1228, 0.0
        %v1245 = vmax.f32 %v1229, 0.0
        %v1246 = vmax.f32 %v1230, 0.0
        %v1247 = vmax.f32 %v1231, 0.0
        %v1248 = vmax.f32 %v1232, 0.0
        %v1249 = vmax.f32 %v1233, 0.0
        %v1250 = vmax.f32 %v1234, 0.0
        %v1251 = vmax.f32 %v1235, 0.0
        %v1252 = vpack.c.bf16 %v1237, %v1236
        %v1253 = vpack.c.bf16 %v1239, %v1238
        %v1254 = vpack.c.bf16 %v1241, %v1240
        %v1255 = vpack.c.bf16 %v1243, %v1242
        %v1256 = vpack.c.bf16 %v1245, %v1244
        %v1257 = vpack.c.bf16 %v1247, %v1246
        %v1258 = vpack.c.bf16 %v1249, %v1248
        %v1259 = vpack.c.bf16 %v1251, %v1250
        %v1260 = vld [vmem:[%s7] sm:$0xf]
        %v1261 = vld [vmem:[%s7 + $0x4] sm:$0xf]
        %v1262 = vld [vmem:[%s7 + $0x8] sm:$0xf]
        %v1263 = vld [vmem:[%s7 + $0xc] sm:$0xf]
        %v1264 = vld [vmem:[%s7 + $0x10] sm:$0xf]
        %v1265 = vld [vmem:[%s7 + $0x14] sm:$0xf]
        %v1266 = vld [vmem:[%s7 + $0x18] sm:$0xf]
        %v1267 = vld [vmem:[%s7 + $0x1c] sm:$0xf]
        %v1268 = vld [vmem:[%s7 + $0x20] sm:$0xf]
        %v1269 = vld [vmem:[%s7 + $0x24] sm:$0xf]
        %v1270 = vld [vmem:[%s7 + $0x28] sm:$0xf]
        %v1271 = vld [vmem:[%s7 + $0x2c] sm:$0xf]
        %v1272 = vld [vmem:[%s7 + $0x30] sm:$0xf]
        %v1273 = vld [vmem:[%s7 + $0x34] sm:$0xf]
        %v1274 = vld [vmem:[%s7 + $0x38] sm:$0xf]
        %v1275 = vld [vmem:[%s7 + $0x3c] sm:$0xf]
        %v1276 = vld [vmem:[%s401] sm:$0xf]
        %v1277 = vld [vmem:[%s401 + $0x4] sm:$0xf]
        %v1278 = vld [vmem:[%s401 + $0x8] sm:$0xf]
        %v1279 = vld [vmem:[%s401 + $0xc] sm:$0xf]
        %v1280 = vld [vmem:[%s401 + $0x10] sm:$0xf]
        %v1281 = vld [vmem:[%s401 + $0x14] sm:$0xf]
        %v1282 = vld [vmem:[%s401 + $0x18] sm:$0xf]
        %v1283 = vld [vmem:[%s401 + $0x1c] sm:$0xf]
        %v1284 = vld [vmem:[%s401 + $0x20] sm:$0xf]
        %v1285 = vld [vmem:[%s401 + $0x24] sm:$0xf]
        %v1286 = vld [vmem:[%s401 + $0x28] sm:$0xf]
        %v1287 = vld [vmem:[%s401 + $0x2c] sm:$0xf]
        %v1288 = vld [vmem:[%s401 + $0x30] sm:$0xf]
        %v1289 = vld [vmem:[%s401 + $0x34] sm:$0xf]
        %v1290 = vld [vmem:[%s401 + $0x38] sm:$0xf]
        %v1291 = vld [vmem:[%s401 + $0x3c] sm:$0xf]
        %v1292 = vld [vmem:[%s9] sm:$0xf]
        %v1293 = vld [vmem:[%s9 + $0x4] sm:$0xf]
        %v1294 = vld [vmem:[%s9 + $0x8] sm:$0xf]
        %v1295 = vld [vmem:[%s9 + $0xc] sm:$0xf]
        %v1296 = vld [vmem:[%s9 + $0x10] sm:$0xf]
        %v1297 = vld [vmem:[%s9 + $0x14] sm:$0xf]
        %v1298 = vld [vmem:[%s9 + $0x18] sm:$0xf]
        %v1299 = vld [vmem:[%s9 + $0x1c] sm:$0xf]
        %v1300 = vld [vmem:[%s9 + $0x20] sm:$0xf]
        %v1301 = vld [vmem:[%s9 + $0x24] sm:$0xf]
        %v1302 = vld [vmem:[%s9 + $0x28] sm:$0xf]
        %v1303 = vld [vmem:[%s9 + $0x2c] sm:$0xf]
        %v1304 = vld [vmem:[%s9 + $0x30] sm:$0xf]
        %v1305 = vld [vmem:[%s9 + $0x34] sm:$0xf]
        %v1306 = vld [vmem:[%s9 + $0x38] sm:$0xf]
        %v1307 = vld [vmem:[%s9 + $0x3c] sm:$0xf]
        %v1324 = vunpack.c.l.b16 %v1276
        %v1325 = vunpack.c.l.b16 %v1277
        %v1326 = vunpack.c.l.b16 %v1278
        %v1327 = vunpack.c.l.b16 %v1279
        %v1328 = vunpack.c.l.b16 %v1280
        %v1329 = vunpack.c.l.b16 %v1281
        %v1330 = vunpack.c.l.b16 %v1282
        %v1331 = vunpack.c.l.b16 %v1283
        %v1332 = vunpack.c.l.b16 %v1284
        %v1333 = vunpack.c.l.b16 %v1285
        %v1334 = vunpack.c.l.b16 %v1286
        %v1335 = vunpack.c.l.b16 %v1287
        %v1336 = vunpack.c.l.b16 %v1288
        %v1337 = vunpack.c.l.b16 %v1289
        %v1338 = vunpack.c.l.b16 %v1290
        %v1339 = vunpack.c.l.b16 %v1291
        %v1340 = vpack.c.b16 %v1325, %v1324
        %v1341 = vpack.c.b16 %v1327, %v1326
        %v1342 = vpack.c.b16 %v1329, %v1328
        %v1343 = vpack.c.b16 %v1331, %v1330
        %v1344 = vpack.c.b16 %v1333, %v1332
        %v1345 = vpack.c.b16 %v1335, %v1334
        %v1346 = vpack.c.b16 %v1337, %v1336
        %v1347 = vpack.c.b16 %v1339, %v1338
        %v1372 = vunpack.c.l.b16 %v1292
        %v1373 = vunpack.c.l.b16 %v1293
        %v1374 = vunpack.c.l.b16 %v1294
        %v1375 = vunpack.c.l.b16 %v1295
        %v1376 = vunpack.c.l.b16 %v1296
        %v1377 = vunpack.c.l.b16 %v1297
        %v1378 = vunpack.c.l.b16 %v1298
        %v1379 = vunpack.c.l.b16 %v1299
        %v1380 = vunpack.c.l.b16 %v1300
        %v1381 = vunpack.c.l.b16 %v1301
        %v1382 = vunpack.c.l.b16 %v1302
        %v1383 = vunpack.c.l.b16 %v1303
        %v1384 = vunpack.c.l.b16 %v1304
        %v1385 = vunpack.c.l.b16 %v1305
        %v1386 = vunpack.c.l.b16 %v1306
        %v1387 = vunpack.c.l.b16 %v1307
        %v1388 = vpack.c.b16 %v1373, %v1372
        %v1389 = vpack.c.b16 %v1375, %v1374
        %v1390 = vpack.c.b16 %v1377, %v1376
        %v1391 = vpack.c.b16 %v1379, %v1378
        %v1392 = vpack.c.b16 %v1381, %v1380
        %v1393 = vpack.c.b16 %v1383, %v1382
        %v1394 = vpack.c.b16 %v1385, %v1384
        %v1395 = vpack.c.b16 %v1387, %v1386
        %1404 = vmatprep.subr.bf16.mxu0 0
        %1405 = vmatpush1.bf16.msra.mxu0 %v1388
        %1406 = vmatprep.subr.bf16.mxu0 0
        %1407 = vmatpush1.bf16.msra.mxu0 %v1389
        %1408 = vmatprep.subr.bf16.mxu0 0
        %1409 = vmatpush1.bf16.msra.mxu0 %v1390
        %1410 = vmatprep.subr.bf16.mxu0 0
        %1411 = vmatpush1.bf16.msra.mxu0 %v1391
        %1412 = vmatprep.subr.bf16.mxu0 0
        %1413 = vmatpush1.bf16.msra.mxu0 %v1392
        %1414 = vmatprep.subr.bf16.mxu0 0
        %1415 = vmatpush1.bf16.msra.mxu0 %v1393
        %1416 = vmatprep.subr.bf16.mxu0 0
        %1417 = vmatpush1.bf16.msra.mxu0 %v1394
        %1418 = vmatprep.subr.bf16.mxu0 0
        %1419 = vmatpush1.bf16.msra.mxu0 %v1395
        %1420 = vmatprep.subr.bf16.mxu0 0
        %1421 = vmatpush1.bf16.msra.mxu0 0
        %1422 = vmatprep.subr.bf16.mxu0 0
        %1423 = vmatpush1.bf16.msra.mxu0 0
        %1424 = vmatprep.subr.bf16.mxu0 0
        %1425 = vmatpush1.bf16.msra.mxu0 0
        %1426 = vmatprep.subr.bf16.mxu0 0
        %1427 = vmatpush1.bf16.msra.mxu0 0
        %1428 = vmatprep.subr.bf16.mxu0 0
        %1429 = vmatpush1.bf16.msra.mxu0 0
        %1430 = vmatprep.subr.bf16.mxu0 0
        %1431 = vmatpush1.bf16.msra.mxu0 0
        %1432 = vmatprep.subr.bf16.mxu0 0
        %1433 = vmatpush1.bf16.msra.mxu0 0
        %1434 = vmatprep.subr.bf16.mxu0 0
        %1435 = vmatpush1.bf16.msra.mxu0 0
        %1436 = vmatprep.mubr.bf16.mxu0 0
        %1437 = vmatmul.mubr.bf16.gmra.mrb[0].mxu0 %v1340
        %v1438 = vpop.f32.mrb[0].mxu0
        %v1439 = vadd.f32 0.0, %v1438
        %v1440 = vpop.f32.mrb[0].mxu0
        %v1441 = vpop.f32.mrb[0].mxu0
        %v1442 = vpop.f32.mrb[0].mxu0
        %1443 = vmatprep.mubr.bf16.mxu0 0
        %1444 = vmatmul.mubr.bf16.gmra.mrb[0].mxu0 %v1341
        %v1445 = vpop.f32.mrb[0].mxu0
        %v1446 = vadd.f32 0.0, %v1445
        %v1447 = vpop.f32.mrb[0].mxu0
        %v1448 = vpop.f32.mrb[0].mxu0
        %v1449 = vpop.f32.mrb[0].mxu0
        %1450 = vmatprep.mubr.bf16.mxu0 0
        %1451 = vmatmul.mubr.bf16.gmra.mrb[0].mxu0 %v1342
        %v1452 = vpop.f32.mrb[0].mxu0
        %v1453 = vadd.f32 0.0, %v1452
        %v1454 = vpop.f32.mrb[0].mxu0
        %v1455 = vpop.f32.mrb[0].mxu0
        %v1456 = vpop.f32.mrb[0].mxu0
        %1457 = vmatprep.mubr.bf16.mxu0 0
        %1458 = vmatmul.mubr.bf16.gmra.mrb[0].mxu0 %v1343
        %v1459 = vpop.f32.mrb[0].mxu0
        %v1460 = vadd.f32 0.0, %v1459
        %v1461 = vpop.f32.mrb[0].mxu0
        %v1462 = vpop.f32.mrb[0].mxu0
        %v1463 = vpop.f32.mrb[0].mxu0
        %1464 = vmatprep.mubr.bf16.mxu0 0
        %1465 = vmatmul.mubr.bf16.gmra.mrb[0].mxu0 %v1344
        %v1466 = vpop.f32.mrb[0].mxu0
        %v1467 = vadd.f32 0.0, %v1466
        %v1468 = vpop.f32.mrb[0].mxu0
        %v1469 = vpop.f32.mrb[0].mxu0
        %v1470 = vpop.f32.mrb[0].mxu0
        %1471 = vmatprep.mubr.bf16.mxu0 0
        %1472 = vmatmul.mubr.bf16.gmra.mrb[0].mxu0 %v1345
        %v1473 = vpop.f32.mrb[0].mxu0
        %v1474 = vadd.f32 0.0, %v1473
        %v1475 = vpop.f32.mrb[0].mxu0
        %v1476 = vpop.f32.mrb[0].mxu0
        %v1477 = vpop.f32.mrb[0].mxu0
        %1478 = vmatprep.mubr.bf16.mxu0 0
        %1479 = vmatmul.mubr.bf16.gmra.mrb[0].mxu0 %v1346
        %v1480 = vpop.f32.mrb[0].mxu0
        %v1481 = vadd.f32 0.0, %v1480
        %v1482 = vpop.f32.mrb[0].mxu0
        %v1483 = vpop.f32.mrb[0].mxu0
        %v1484 = vpop.f32.mrb[0].mxu0
        %1485 = vmatprep.mubr.bf16.mxu0 0
        %1486 = vmatmul.mubr.bf16.gmra.mrb[0].mxu0 %v1347
        %v1487 = vpop.f32.mrb[0].mxu0
        %v1488 = vadd.f32 0.0, %v1487
        %v1489 = vpop.f32.mrb[0].mxu0
        %v1490 = vpop.f32.mrb[0].mxu0
        %v1491 = vpop.f32.mrb[0].mxu0
        %1492 = vdwg.mxu0
        %v1509 = vunpack.c.l.b16 %v1260
        %v1510 = vunpack.c.l.b16 %v1261
        %v1511 = vunpack.c.l.b16 %v1262
        %v1512 = vunpack.c.l.b16 %v1263
        %v1513 = vunpack.c.l.b16 %v1264
        %v1514 = vunpack.c.l.b16 %v1265
        %v1515 = vunpack.c.l.b16 %v1266
        %v1516 = vunpack.c.l.b16 %v1267
        %v1517 = vunpack.c.l.b16 %v1268
        %v1518 = vunpack.c.l.b16 %v1269
        %v1519 = vunpack.c.l.b16 %v1270
        %v1520 = vunpack.c.l.b16 %v1271
        %v1521 = vunpack.c.l.b16 %v1272
        %v1522 = vunpack.c.l.b16 %v1273
        %v1523 = vunpack.c.l.b16 %v1274
        %v1524 = vunpack.c.l.b16 %v1275
        %v1525 = vpack.c.b16 %v1510, %v1509
        %v1526 = vpack.c.b16 %v1512, %v1511
        %v1527 = vpack.c.b16 %v1514, %v1513
        %v1528 = vpack.c.b16 %v1516, %v1515
        %v1529 = vpack.c.b16 %v1518, %v1517
        %v1530 = vpack.c.b16 %v1520, %v1519
        %v1531 = vpack.c.b16 %v1522, %v1521
        %v1532 = vpack.c.b16 %v1524, %v1523
        %1541 = vmatprep.subr.bf16.mxu0 0
        %1542 = vmatpush1.bf16.msra.mxu0 %v1525
        %1543 = vmatprep.subr.bf16.mxu0 0
        %1544 = vmatpush1.bf16.msra.mxu0 %v1526
        %1545 = vmatprep.subr.bf16.mxu0 0
        %1546 = vmatpush1.bf16.msra.mxu0 %v1527
        %1547 = vmatprep.subr.bf16.mxu0 0
        %1548 = vmatpush1.bf16.msra.mxu0 %v1528
        %1549 = vmatprep.subr.bf16.mxu0 0
        %1550 = vmatpush1.bf16.msra.mxu0 %v1529
        %1551 = vmatprep.subr.bf16.mxu0 0
        %1552 = vmatpush1.bf16.msra.mxu0 %v1530
        %1553 = vmatprep.subr.bf16.mxu0 0
        %1554 = vmatpush1.bf16.msra.mxu0 %v1531
        %1555 = vmatprep.subr.bf16.mxu0 0
        %1556 = vmatpush1.bf16.msra.mxu0 %v1532
        %1557 = vmatprep.subr.bf16.mxu0 0
        %1558 = vmatpush1.bf16.msra.mxu0 0
        %1559 = vmatprep.subr.bf16.mxu0 0
        %1560 = vmatpush1.bf16.msra.mxu0 0
        %1561 = vmatprep.subr.bf16.mxu0 0
        %1562 = vmatpush1.bf16.msra.mxu0 0
        %1563 = vmatprep.subr.bf16.mxu0 0
        %1564 = vmatpush1.bf16.msra.mxu0 0
        %1565 = vmatprep.subr.bf16.mxu0 0
        %1566 = vmatpush1.bf16.msra.mxu0 0
        %1567 = vmatprep.subr.bf16.mxu0 0
        %1568 = vmatpush1.bf16.msra.mxu0 0
        %1569 = vmatprep.subr.bf16.mxu0 0
        %1570 = vmatpush1.bf16.msra.mxu0 0
        %1571 = vmatprep.subr.bf16.mxu0 0
        %1572 = vmatpush1.bf16.msra.mxu0 0
        %1573 = vmatprep.mubr.bf16.mxu0 0
        %1574 = vmatmul.mubr.bf16.gmra.mrb[0].mxu0 %v1252
        %v1575 = vpop.f32.mrb[0].mxu0
        %v1576 = vadd.f32 %v1439, %v1575
        %v1577 = vpop.f32.mrb[0].mxu0
        %v1578 = vpop.f32.mrb[0].mxu0
        %v1579 = vpop.f32.mrb[0].mxu0
        %1580 = vmatprep.mubr.bf16.mxu0 0
        %1581 = vmatmul.mubr.bf16.gmra.mrb[0].mxu0 %v1253
        %v1582 = vpop.f32.mrb[0].mxu0
        %v1583 = vadd.f32 %v1446, %v1582
        %v1584 = vpop.f32.mrb[0].mxu0
        %v1585 = vpop.f32.mrb[0].mxu0
        %v1586 = vpop.f32.mrb[0].mxu0
        %1587 = vmatprep.mubr.bf16.mxu0 0
        %1588 = vmatmul.mubr.bf16.gmra.mrb[0].mxu0 %v1254
        %v1589 = vpop.f32.mrb[0].mxu0
        %v1590 = vadd.f32 %v1453, %v1589
        %v1591 = vpop.f32.mrb[0].mxu0
        %v1592 = vpop.f32.mrb[0].mxu0
        %v1593 = vpop.f32.mrb[0].mxu0
        %1594 = vmatprep.mubr.bf16.mxu0 0
        %1595 = vmatmul.mubr.bf16.gmra.mrb[0].mxu0 %v1255
        %v1596 = vpop.f32.mrb[0].mxu0
        %v1597 = vadd.f32 %v1460, %v1596
        %v1598 = vpop.f32.mrb[0].mxu0
        %v1599 = vpop.f32.mrb[0].mxu0
        %v1600 = vpop.f32.mrb[0].mxu0
        %1601 = vmatprep.mubr.bf16.mxu0 0
        %1602 = vmatmul.mubr.bf16.gmra.mrb[0].mxu0 %v1256
        %v1603 = vpop.f32.mrb[0].mxu0
        %v1604 = vadd.f32 %v1467, %v1603
        %v1605 = vpop.f32.mrb[0].mxu0
        %v1606 = vpop.f32.mrb[0].mxu0
        %v1607 = vpop.f32.mrb[0].mxu0
        %1608 = vmatprep.mubr.bf16.mxu0 0
        %1609 = vmatmul.mubr.bf16.gmra.mrb[0].mxu0 %v1257
        %v1610 = vpop.f32.mrb[0].mxu0
        %v1611 = vadd.f32 %v1474, %v1610
        %v1612 = vpop.f32.mrb[0].mxu0
        %v1613 = vpop.f32.mrb[0].mxu0
        %v1614 = vpop.f32.mrb[0].mxu0
        %1615 = vmatprep.mubr.bf16.mxu0 0
        %1616 = vmatmul.mubr.bf16.gmra.mrb[0].mxu0 %v1258
        %v1617 = vpop.f32.mrb[0].mxu0
        %v1618 = vadd.f32 %v1481, %v1617
        %v1619 = vpop.f32.mrb[0].mxu0
        %v1620 = vpop.f32.mrb[0].mxu0
        %v1621 = vpop.f32.mrb[0].mxu0
        %1622 = vmatprep.mubr.bf16.mxu0 0
        %1623 = vmatmul.mubr.bf16.gmra.mrb[0].mxu0 %v1259
        %v1624 = vpop.f32.mrb[0].mxu0
        %v1625 = vadd.f32 %v1488, %v1624
        %v1626 = vpop.f32.mrb[0].mxu0
        %v1627 = vpop.f32.mrb[0].mxu0
        %v1628 = vpop.f32.mrb[0].mxu0
        %1629 = vdwg.mxu0
        %v1630 = vld [vmem:[%s8] sm:$0x1]
        %v1632 = vlaneseq
        %v1633 = vshrl.u32 %v1632, 7
        %v1634 = vsub.s32 0, %v1633
        %v1635 = vrot.slane %v1630, %v1634
        %v1637 = vadd.f32 %v1576, %v1635
        %v1638 = vadd.f32 %v1583, %v1635
        %v1639 = vadd.f32 %v1590, %v1635
        %v1640 = vadd.f32 %v1597, %v1635
        %v1641 = vadd.f32 %v1604, %v1635
        %v1642 = vadd.f32 %v1611, %v1635
        %v1643 = vadd.f32 %v1618, %v1635
        %v1644 = vadd.f32 %v1625, %v1635
        %v1645 = vmax.f32 %v1637, 0.0
        %v1646 = vmax.f32 %v1638, 0.0
        %v1647 = vmax.f32 %v1639, 0.0
        %v1648 = vmax.f32 %v1640, 0.0
        %v1649 = vmax.f32 %v1641, 0.0
        %v1650 = vmax.f32 %v1642, 0.0
        %v1651 = vmax.f32 %v1643, 0.0
        %v1652 = vmax.f32 %v1644, 0.0
        %v1653 = vpack.c.bf16 %v1645, %v1645
        %v1654 = vpack.c.bf16 %v1646, %v1646
        %v1655 = vpack.c.bf16 %v1647, %v1647
        %v1656 = vpack.c.bf16 %v1648, %v1648
        %v1657 = vpack.c.bf16 %v1649, %v1649
        %v1658 = vpack.c.bf16 %v1650, %v1650
        %v1659 = vpack.c.bf16 %v1651, %v1651
        %v1660 = vpack.c.bf16 %v1652, %v1652
        %1661 = vst [vmem:[%s419] sm:$0xf] %v1653
        %1662 = vst [vmem:[%s419 + $0x4] sm:$0xf] %v1654
        %1663 = vst [vmem:[%s419 + $0x8] sm:$0xf] %v1655
        %1664 = vst [vmem:[%s419 + $0xc] sm:$0xf] %v1656
        %1665 = vst [vmem:[%s419 + $0x10] sm:$0xf] %v1657
        %1666 = vst [vmem:[%s419 + $0x14] sm:$0xf] %v1658
        %1667 = vst [vmem:[%s419 + $0x18] sm:$0xf] %v1659
        %1668 = vst [vmem:[%s419 + $0x1c] sm:$0xf] %v1660
      $region72: #{bottleneck_forward.1} parent=55 // pred_fallthru
        _
      %p1669 = scmp.lt.s32.totalorder %s31, 1
      %s1670 = scalar_select %p1669, %s31, 1
      %s1671 = smul.addr %s1670, 8
      %s1672 = smul.addr %s1671, 4
      %s1673 = scalar_lea.vmem %s10, %s1672
      // Predicated region
      $region73: #{bottleneck_forward.1} parent=55 // pred_check
        %p1674 = pneg %p267
      $region74: #{bottleneck_forward.1} parent=55 // pred_check_branch
        %1676 = sbr.rel (%p1674) target = $region76
      $region75: #{bottleneck_forward.1} parent=55 // pred_region
        _
      $region76: #{bottleneck_forward.1} parent=55 // pred_fallthru
        _
    $region56: #{bottleneck_forward.1} parent=5 // pred_fallthru
      _
    %p1677 = scmp.le.s32.totalorder 2, %s22
    // Predicated region
    $region77: #{bottleneck_forward.1} parent=5 // pred_check
      %p1678 = pneg %p1677
    $region78: #{bottleneck_forward.1} parent=5 // pred_check_branch
      %1680 = sbr.rel (%p1678) target = $region80
    $region79: #{bottleneck_forward.1} parent=5 // pred_region
      %s1681 = ssub.s32 %s22, 2
      // Predicated region
      $region81: #{bottleneck_forward.1} parent=79 // pred_check
        %p1682 = pneg %p273
      $region82: #{bottleneck_forward.1} parent=79 // pred_check_branch
        %1684 = sbr.rel (%p1682) target = $region84
      $region83: #{bottleneck_forward.1} parent=79 // pred_region
        %p1685 = scmp.lt.s32.totalorder %s33, 1
        %s1686 = scalar_select %p1685, %s33, 1
        %s1687 = smul.addr %s1686, 8
        %s1688 = smul.addr %s1687, 4
        %s1689 = scalar_lea.vmem %s10, %s1688
      $region84: #{bottleneck_forward.1} parent=79 // pred_fallthru
        _
    $region80: #{bottleneck_forward.1} parent=5 // pred_fallthru
      _
  $region6: #{bottleneck_forward.1} parent=0 // loop_footer
    %s26 = sadd.s32 1, %s22
  $region7: #{bottleneck_forward.1} parent=0 // loop_footer_branch
    %21 = sbr.rel target = $region3
  $region8: #{bottleneck_forward.1} parent=0 // loop_exit
    _

</llo_original>
